<compile_context>
chip_gen: v7x
topology: tpu7x:2x2x1
jax: 0.10.0
libtpu: 0.0.40
codegen_flags: <defaults>
</compile_context>

<pallas_src>
import jax
import jax.numpy as jnp
from jax import lax
from jax.experimental import pallas as pl
from jax.experimental.pallas import tpu as pltpu


# ----------------------------------------------------------------------------
# Pallas kernel: unrolled LSTM recurrence (h,c in vregs) + linear head
# ----------------------------------------------------------------------------
def lstm_head_kernel(gx_ref,     # (T*B, 4*HP) pre-gathered gate-table rows (x-proj + bias)
                     whh_ref,    # (HP, 4*HP)  recurrent weights, gate order i,f,o,g, lane-padded
                     wout_ref,   # (1, HP)     output weight row, lane-padded
                     bout_ref,   # (1, 1)      output bias
                     out_ref):   # (B, 1)      logits
    HP = whh_ref.shape[0]
    B = out_ref.shape[0]
    T = gx_ref.shape[0] // B

    whh = whh_ref[...]                               # loop-invariant RHS

    h = jnp.zeros((B, HP), jnp.float32)
    c = jnp.zeros((B, HP), jnp.float32)

    # Fully-unrolled recurrence: only h @ W_hh is data-dependent per step.
    for t in range(T):
        gates = (gx_ref[pl.ds(t * B, B), :]
                 + jnp.dot(h, whh, preferred_element_type=jnp.float32))  # (B, 4*HP)
        # sigmoid(x) == 0.5*tanh(0.5*x) + 0.5  -> single EUP pass for i|f|o.
        sig = 0.5 * jnp.tanh(0.5 * gates[:, :3 * HP]) + 0.5
        g_g = jnp.tanh(gates[:, 3 * HP:])
        i_g = sig[:, 0 * HP:1 * HP]
        f_g = sig[:, 1 * HP:2 * HP]
        o_g = sig[:, 2 * HP:3 * HP]
        c = f_g * c + i_g * g_g
        h = o_g * jnp.tanh(c)

    # Linear(H, 1): lane reduction on VPU/XLU (padded lanes of w_out are 0).
    out_ref[...] = (jnp.sum(h * wout_ref[...], axis=-1, keepdims=True)
                    + bout_ref[...])


# ----------------------------------------------------------------------------
# One-time parameter preparation (hoisted out of the forward path)
# ----------------------------------------------------------------------------
def prepare_params(params):
    """Fold embedding + input projection + bias into a gate table, reorder
    gates to i,f,o,g, and pad every gate block to 128 lanes."""
    H = params["w_hh"].shape[1]
    HP = ((H + 127) // 128) * 128

    def reorder(w):                       # PyTorch i,f,g,o -> i,f,o,g (rows)
        i, f, g, o = jnp.split(w, 4, axis=0)
        return jnp.concatenate([i, f, o, g], axis=0)

    def pad_gate_cols(m):                 # (..., 4H) -> (..., 4*HP), zero-pad each gate block
        parts = jnp.split(m, 4, axis=-1)
        pad_cfg = [(0, 0)] * (m.ndim - 1) + [(0, HP - H)]
        return jnp.concatenate([jnp.pad(p, pad_cfg) for p in parts], axis=-1)

    emb = params["embedding"].astype(jnp.float32)                       # (V, E)
    w_ih_r = reorder(params["w_ih"]).astype(jnp.float32)                # (4H, E)
    bias_r = reorder(params["b_ih"] + params["b_hh"]).astype(jnp.float32)  # (4H,)

    # Fused embedding + input projection + bias: (V, 4H) -> lane-padded (V, 4*HP)
    gate_tbl = pad_gate_cols(emb @ w_ih_r.T + bias_r[None, :])

    w_hh_t = reorder(params["w_hh"]).astype(jnp.float32).T              # (H, 4H)
    w_hh_p = jnp.pad(pad_gate_cols(w_hh_t), ((0, HP - H), (0, 0)))      # (HP, 4*HP)

    w_out_p = jnp.pad(params["w_out"].reshape(1, H).astype(jnp.float32),
                      ((0, 0), (0, HP - H)))                            # (1, HP)
    b_out = params["b_out"].reshape(1, 1).astype(jnp.float32)           # (1, 1)

    return {"gate_tbl": gate_tbl, "w_hh": w_hh_p,
            "w_out": w_out_p, "b_out": b_out}


# ----------------------------------------------------------------------------
# Forward wrapper: gate-row gather, batch padding, pallas_call
# ----------------------------------------------------------------------------
def sumo_nn_forward(text, prep):
    """text: (B, T) int32 token ids.  prep: prepare_params output.
    Returns logits (B, 1) float32."""
    B, T = text.shape
    HP = prep["w_hh"].shape[0]

    # Pad batch to the f32 sublane width (8); padded rows are discarded later.
    B_pad = ((B + 7) // 8) * 8
    text_p = jnp.pad(text, ((0, B_pad - B), (0, 0)))

    # Time-major flat gather of precomputed gate rows: the only per-call XLA
    # op besides the Pallas call itself.
    ids = text_p.T.reshape(-1)                                   # (T*B_pad,)
    gx = jnp.take(prep["gate_tbl"], ids, axis=0)                 # (T*B_pad, 4*HP)

    logits_padded = pl.pallas_call(
        lstm_head_kernel,
        out_shape=jax.ShapeDtypeStruct((B_pad, 1), jnp.float32),
        in_specs=[pl.BlockSpec(memory_space=pltpu.MemorySpace.VMEM)] * 4,
        out_specs=pl.BlockSpec(memory_space=pltpu.MemorySpace.VMEM),
    )(gx, prep["w_hh"], prep["w_out"], prep["b_out"])

    return logits_padded[:B]


# ----------------------------------------------------------------------------
# Pure-JAX reference (PyTorch i,f,g,o semantics) for correctness check
# ----------------------------------------------------------------------------
def sumo_nn_reference(text, params):
    emb = jnp.take(params["embedding"], text, axis=0)            # (B, T, E)
    H = params["w_hh"].shape[1]
    B = text.shape[0]
    wih, whh = params["w_ih"], params["w_hh"]
    bias = params["b_ih"] + params["b_hh"]

    def step(carry, x_t):
        h, c = carry
        gates = x_t @ wih.T + h @ whh.T + bias
        i = jax.nn.sigmoid(gates[:, 0 * H:1 * H])
        f = jax.nn.sigmoid(gates[:, 1 * H:2 * H])
        g = jnp.tanh(gates[:, 2 * H:3 * H])
        o = jax.nn.sigmoid(gates[:, 3 * H:4 * H])
        c = f * c + i * g
        h = o * jnp.tanh(c)
        return (h, c), None

    h0 = jnp.zeros((B, H), jnp.float32)
    c0 = jnp.zeros((B, H), jnp.float32)
    (h_last, _), _ = lax.scan(step, (h0, c0), jnp.transpose(emb, (1, 0, 2)))
    return h_last @ params["w_out"].T + params["b_out"]


# ----------------------------------------------------------------------------
# Deterministic parameter init (nn.Embedding / nn.LSTM / nn.Linear shapes)
# ----------------------------------------------------------------------------
def init_params(key, vocab_size, embed_dim):
    H = vocab_size          # LSTM hidden size == vocab_size in the module
    ks = jax.random.split(key, 7)
    s = 1.0 / jnp.sqrt(H)
    return {
        "embedding": jax.random.normal(ks[0], (vocab_size, embed_dim), jnp.float32),
        "w_ih": jax.random.uniform(ks[1], (4 * H, embed_dim), jnp.float32, -s, s),
        "w_hh": jax.random.uniform(ks[2], (4 * H, H), jnp.float32, -s, s),
        "b_ih": jax.random.uniform(ks[3], (4 * H,), jnp.float32, -s, s),
        "b_hh": jax.random.uniform(ks[4], (4 * H,), jnp.float32, -s, s),
        "w_out": jax.random.uniform(ks[5], (1, H), jnp.float32, -s, s),
        "b_out": jax.random.uniform(ks[6], (1,), jnp.float32, -s, s),
    }


if __name__ == "__main__":
    # Small shapes consistent with the module: 15-mer tokenized to 14 tokens.
    VOCAB = 32
    EMBED = 16
    BATCH = 4
    SEQ = 14

    key = jax.random.PRNGKey(0)
    pkey, tkey = jax.random.split(key)
    params = init_params(pkey, VOCAB, EMBED)
    text = jax.random.randint(tkey, (BATCH, SEQ), 0, VOCAB, dtype=jnp.int32)

    # One-time weight preparation (hoisted out of the per-call forward path).
    prep = jax.tree_util.tree_map(jax.block_until_ready, prepare_params(params))

    fwd = jax.jit(sumo_nn_forward)
    logits = fwd(text, prep)
    jax.block_until_ready(logits)

    ref = sumo_nn_reference(text, params)
    assert logits.shape == (BATCH, 1)
    assert jnp.allclose(logits, ref, atol=1e-4, rtol=1e-4), "mismatch vs reference"

    print("KERNEL_OK")
</pallas_src>

<mosaic_0001>
module attributes {stable_mosaic.version = 11 : i64} {
  func.func @lstm_head_kernel(%arg0: memref<112x512xf32, #tpu.memory_space<vmem>>, %arg1: memref<128x512xf32, #tpu.memory_space<vmem>>, %arg2: memref<1x128xf32, #tpu.memory_space<vmem>>, %arg3: memref<1x1xf32, #tpu.memory_space<vmem>>, %arg4: memref<8x1xf32, #tpu.memory_space<vmem>>) attributes {dimension_semantics = [], scalar_prefetch = 0 : i64, scratch_operands = 0 : i64, tpu.core_type = #tpu.core_type<tc>} {
    %c0 = arith.constant 0 : index
    %c0_0 = arith.constant 0 : index
    %0 = vector.load %arg1[%c0, %c0_0] : memref<128x512xf32, #tpu.memory_space<vmem>>, vector<128x512xf32>
    %cst = arith.constant 0.000000e+00 : f32
    %1 = vector.broadcast %cst : f32 to vector<8x128xf32>
    %cst_1 = arith.constant 0.000000e+00 : f32
    %2 = vector.broadcast %cst_1 : f32 to vector<8x128xf32>
    %c0_2 = arith.constant 0 : index
    %c0_3 = arith.constant 0 : index
    %3 = vector.load %arg0[%c0_2, %c0_3] : memref<112x512xf32, #tpu.memory_space<vmem>>, vector<8x512xf32>
    %cst_4 = arith.constant dense<0.000000e+00> : vector<8x512xf32>
    %4 = tpu.matmul %1, %0, %cst_4 {dimension_numbers = #tpu.dot_dimension_numbers<[1], [0], [0], [1], [0, 0, 1, 1], [], []>} : vector<8x128xf32>, vector<128x512xf32>, vector<8x512xf32> -> vector<8x512xf32>
    %5 = arith.addf %3, %4 : vector<8x512xf32>
    %6 = vector.extract_strided_slice %5 {offsets = [0, 0], sizes = [8, 384], strides = [1, 1]} : vector<8x512xf32> to vector<8x384xf32>
    %cst_5 = arith.constant 5.000000e-01 : f32
    %7 = vector.broadcast %cst_5 : f32 to vector<8x384xf32>
    %8 = arith.mulf %7, %6 : vector<8x384xf32>
    %9 = math.tanh %8 : vector<8x384xf32>
    %cst_6 = arith.constant 5.000000e-01 : f32
    %10 = vector.broadcast %cst_6 : f32 to vector<8x384xf32>
    %11 = arith.mulf %10, %9 : vector<8x384xf32>
    %cst_7 = arith.constant 5.000000e-01 : f32
    %12 = vector.broadcast %cst_7 : f32 to vector<8x384xf32>
    %13 = arith.addf %11, %12 : vector<8x384xf32>
    %14 = vector.extract_strided_slice %5 {offsets = [0, 384], sizes = [8, 128], strides = [1, 1]} : vector<8x512xf32> to vector<8x128xf32>
    %15 = math.tanh %14 : vector<8x128xf32>
    %16 = vector.extract_strided_slice %13 {offsets = [0, 0], sizes = [8, 128], strides = [1, 1]} : vector<8x384xf32> to vector<8x128xf32>
    %17 = vector.extract_strided_slice %13 {offsets = [0, 128], sizes = [8, 128], strides = [1, 1]} : vector<8x384xf32> to vector<8x128xf32>
    %18 = vector.extract_strided_slice %13 {offsets = [0, 256], sizes = [8, 128], strides = [1, 1]} : vector<8x384xf32> to vector<8x128xf32>
    %19 = arith.mulf %17, %2 : vector<8x128xf32>
    %20 = arith.mulf %16, %15 : vector<8x128xf32>
    %21 = arith.addf %19, %20 : vector<8x128xf32>
    %22 = math.tanh %21 : vector<8x128xf32>
    %23 = arith.mulf %18, %22 : vector<8x128xf32>
    %c8 = arith.constant 8 : index
    %c0_8 = arith.constant 0 : index
    %24 = vector.load %arg0[%c8, %c0_8] : memref<112x512xf32, #tpu.memory_space<vmem>>, vector<8x512xf32>
    %cst_9 = arith.constant dense<0.000000e+00> : vector<8x512xf32>
    %25 = tpu.matmul %23, %0, %cst_9 {dimension_numbers = #tpu.dot_dimension_numbers<[1], [0], [0], [1], [0, 0, 1, 1], [], []>} : vector<8x128xf32>, vector<128x512xf32>, vector<8x512xf32> -> vector<8x512xf32>
    %26 = arith.addf %24, %25 : vector<8x512xf32>
    %27 = vector.extract_strided_slice %26 {offsets = [0, 0], sizes = [8, 384], strides = [1, 1]} : vector<8x512xf32> to vector<8x384xf32>
    %cst_10 = arith.constant 5.000000e-01 : f32
    %28 = vector.broadcast %cst_10 : f32 to vector<8x384xf32>
    %29 = arith.mulf %28, %27 : vector<8x384xf32>
    %30 = math.tanh %29 : vector<8x384xf32>
    %cst_11 = arith.constant 5.000000e-01 : f32
    %31 = vector.broadcast %cst_11 : f32 to vector<8x384xf32>
    %32 = arith.mulf %31, %30 : vector<8x384xf32>
    %cst_12 = arith.constant 5.000000e-01 : f32
    %33 = vector.broadcast %cst_12 : f32 to vector<8x384xf32>
    %34 = arith.addf %32, %33 : vector<8x384xf32>
    %35 = vector.extract_strided_slice %26 {offsets = [0, 384], sizes = [8, 128], strides = [1, 1]} : vector<8x512xf32> to vector<8x128xf32>
    %36 = math.tanh %35 : vector<8x128xf32>
    %37 = vector.extract_strided_slice %34 {offsets = [0, 0], sizes = [8, 128], strides = [1, 1]} : vector<8x384xf32> to vector<8x128xf32>
    %38 = vector.extract_strided_slice %34 {offsets = [0, 128], sizes = [8, 128], strides = [1, 1]} : vector<8x384xf32> to vector<8x128xf32>
    %39 = vector.extract_strided_slice %34 {offsets = [0, 256], sizes = [8, 128], strides = [1, 1]} : vector<8x384xf32> to vector<8x128xf32>
    %40 = arith.mulf %38, %21 : vector<8x128xf32>
    %41 = arith.mulf %37, %36 : vector<8x128xf32>
    %42 = arith.addf %40, %41 : vector<8x128xf32>
    %43 = math.tanh %42 : vector<8x128xf32>
    %44 = arith.mulf %39, %43 : vector<8x128xf32>
    %c16 = arith.constant 16 : index
    %c0_13 = arith.constant 0 : index
    %45 = vector.load %arg0[%c16, %c0_13] : memref<112x512xf32, #tpu.memory_space<vmem>>, vector<8x512xf32>
    %cst_14 = arith.constant dense<0.000000e+00> : vector<8x512xf32>
    %46 = tpu.matmul %44, %0, %cst_14 {dimension_numbers = #tpu.dot_dimension_numbers<[1], [0], [0], [1], [0, 0, 1, 1], [], []>} : vector<8x128xf32>, vector<128x512xf32>, vector<8x512xf32> -> vector<8x512xf32>
    %47 = arith.addf %45, %46 : vector<8x512xf32>
    %48 = vector.extract_strided_slice %47 {offsets = [0, 0], sizes = [8, 384], strides = [1, 1]} : vector<8x512xf32> to vector<8x384xf32>
    %cst_15 = arith.constant 5.000000e-01 : f32
    %49 = vector.broadcast %cst_15 : f32 to vector<8x384xf32>
    %50 = arith.mulf %49, %48 : vector<8x384xf32>
    %51 = math.tanh %50 : vector<8x384xf32>
    %cst_16 = arith.constant 5.000000e-01 : f32
    %52 = vector.broadcast %cst_16 : f32 to vector<8x384xf32>
    %53 = arith.mulf %52, %51 : vector<8x384xf32>
    %cst_17 = arith.constant 5.000000e-01 : f32
    %54 = vector.broadcast %cst_17 : f32 to vector<8x384xf32>
    %55 = arith.addf %53, %54 : vector<8x384xf32>
    %56 = vector.extract_strided_slice %47 {offsets = [0, 384], sizes = [8, 128], strides = [1, 1]} : vector<8x512xf32> to vector<8x128xf32>
    %57 = math.tanh %56 : vector<8x128xf32>
    %58 = vector.extract_strided_slice %55 {offsets = [0, 0], sizes = [8, 128], strides = [1, 1]} : vector<8x384xf32> to vector<8x128xf32>
    %59 = vector.extract_strided_slice %55 {offsets = [0, 128], sizes = [8, 128], strides = [1, 1]} : vector<8x384xf32> to vector<8x128xf32>
    %60 = vector.extract_strided_slice %55 {offsets = [0, 256], sizes = [8, 128], strides = [1, 1]} : vector<8x384xf32> to vector<8x128xf32>
    %61 = arith.mulf %59, %42 : vector<8x128xf32>
    %62 = arith.mulf %58, %57 : vector<8x128xf32>
    %63 = arith.addf %61, %62 : vector<8x128xf32>
    %64 = math.tanh %63 : vector<8x128xf32>
    %65 = arith.mulf %60, %64 : vector<8x128xf32>
    %c24 = arith.constant 24 : index
    %c0_18 = arith.constant 0 : index
    %66 = vector.load %arg0[%c24, %c0_18] : memref<112x512xf32, #tpu.memory_space<vmem>>, vector<8x512xf32>
    %cst_19 = arith.constant dense<0.000000e+00> : vector<8x512xf32>
    %67 = tpu.matmul %65, %0, %cst_19 {dimension_numbers = #tpu.dot_dimension_numbers<[1], [0], [0], [1], [0, 0, 1, 1], [], []>} : vector<8x128xf32>, vector<128x512xf32>, vector<8x512xf32> -> vector<8x512xf32>
    %68 = arith.addf %66, %67 : vector<8x512xf32>
    %69 = vector.extract_strided_slice %68 {offsets = [0, 0], sizes = [8, 384], strides = [1, 1]} : vector<8x512xf32> to vector<8x384xf32>
    %cst_20 = arith.constant 5.000000e-01 : f32
    %70 = vector.broadcast %cst_20 : f32 to vector<8x384xf32>
    %71 = arith.mulf %70, %69 : vector<8x384xf32>
    %72 = math.tanh %71 : vector<8x384xf32>
    %cst_21 = arith.constant 5.000000e-01 : f32
    %73 = vector.broadcast %cst_21 : f32 to vector<8x384xf32>
    %74 = arith.mulf %73, %72 : vector<8x384xf32>
    %cst_22 = arith.constant 5.000000e-01 : f32
    %75 = vector.broadcast %cst_22 : f32 to vector<8x384xf32>
    %76 = arith.addf %74, %75 : vector<8x384xf32>
    %77 = vector.extract_strided_slice %68 {offsets = [0, 384], sizes = [8, 128], strides = [1, 1]} : vector<8x512xf32> to vector<8x128xf32>
    %78 = math.tanh %77 : vector<8x128xf32>
    %79 = vector.extract_strided_slice %76 {offsets = [0, 0], sizes = [8, 128], strides = [1, 1]} : vector<8x384xf32> to vector<8x128xf32>
    %80 = vector.extract_strided_slice %76 {offsets = [0, 128], sizes = [8, 128], strides = [1, 1]} : vector<8x384xf32> to vector<8x128xf32>
    %81 = vector.extract_strided_slice %76 {offsets = [0, 256], sizes = [8, 128], strides = [1, 1]} : vector<8x384xf32> to vector<8x128xf32>
    %82 = arith.mulf %80, %63 : vector<8x128xf32>
    %83 = arith.mulf %79, %78 : vector<8x128xf32>
    %84 = arith.addf %82, %83 : vector<8x128xf32>
    %85 = math.tanh %84 : vector<8x128xf32>
    %86 = arith.mulf %81, %85 : vector<8x128xf32>
    %c32 = arith.constant 32 : index
    %c0_23 = arith.constant 0 : index
    %87 = vector.load %arg0[%c32, %c0_23] : memref<112x512xf32, #tpu.memory_space<vmem>>, vector<8x512xf32>
    %cst_24 = arith.constant dense<0.000000e+00> : vector<8x512xf32>
    %88 = tpu.matmul %86, %0, %cst_24 {dimension_numbers = #tpu.dot_dimension_numbers<[1], [0], [0], [1], [0, 0, 1, 1], [], []>} : vector<8x128xf32>, vector<128x512xf32>, vector<8x512xf32> -> vector<8x512xf32>
    %89 = arith.addf %87, %88 : vector<8x512xf32>
    %90 = vector.extract_strided_slice %89 {offsets = [0, 0], sizes = [8, 384], strides = [1, 1]} : vector<8x512xf32> to vector<8x384xf32>
    %cst_25 = arith.constant 5.000000e-01 : f32
    %91 = vector.broadcast %cst_25 : f32 to vector<8x384xf32>
    %92 = arith.mulf %91, %90 : vector<8x384xf32>
    %93 = math.tanh %92 : vector<8x384xf32>
    %cst_26 = arith.constant 5.000000e-01 : f32
    %94 = vector.broadcast %cst_26 : f32 to vector<8x384xf32>
    %95 = arith.mulf %94, %93 : vector<8x384xf32>
    %cst_27 = arith.constant 5.000000e-01 : f32
    %96 = vector.broadcast %cst_27 : f32 to vector<8x384xf32>
    %97 = arith.addf %95, %96 : vector<8x384xf32>
    %98 = vector.extract_strided_slice %89 {offsets = [0, 384], sizes = [8, 128], strides = [1, 1]} : vector<8x512xf32> to vector<8x128xf32>
    %99 = math.tanh %98 : vector<8x128xf32>
    %100 = vector.extract_strided_slice %97 {offsets = [0, 0], sizes = [8, 128], strides = [1, 1]} : vector<8x384xf32> to vector<8x128xf32>
    %101 = vector.extract_strided_slice %97 {offsets = [0, 128], sizes = [8, 128], strides = [1, 1]} : vector<8x384xf32> to vector<8x128xf32>
    %102 = vector.extract_strided_slice %97 {offsets = [0, 256], sizes = [8, 128], strides = [1, 1]} : vector<8x384xf32> to vector<8x128xf32>
    %103 = arith.mulf %101, %84 : vector<8x128xf32>
    %104 = arith.mulf %100, %99 : vector<8x128xf32>
    %105 = arith.addf %103, %104 : vector<8x128xf32>
    %106 = math.tanh %105 : vector<8x128xf32>
    %107 = arith.mulf %102, %106 : vector<8x128xf32>
    %c40 = arith.constant 40 : index
    %c0_28 = arith.constant 0 : index
    %108 = vector.load %arg0[%c40, %c0_28] : memref<112x512xf32, #tpu.memory_space<vmem>>, vector<8x512xf32>
    %cst_29 = arith.constant dense<0.000000e+00> : vector<8x512xf32>
    %109 = tpu.matmul %107, %0, %cst_29 {dimension_numbers = #tpu.dot_dimension_numbers<[1], [0], [0], [1], [0, 0, 1, 1], [], []>} : vector<8x128xf32>, vector<128x512xf32>, vector<8x512xf32> -> vector<8x512xf32>
    %110 = arith.addf %108, %109 : vector<8x512xf32>
    %111 = vector.extract_strided_slice %110 {offsets = [0, 0], sizes = [8, 384], strides = [1, 1]} : vector<8x512xf32> to vector<8x384xf32>
    %cst_30 = arith.constant 5.000000e-01 : f32
    %112 = vector.broadcast %cst_30 : f32 to vector<8x384xf32>
    %113 = arith.mulf %112, %111 : vector<8x384xf32>
    %114 = math.tanh %113 : vector<8x384xf32>
    %cst_31 = arith.constant 5.000000e-01 : f32
    %115 = vector.broadcast %cst_31 : f32 to vector<8x384xf32>
    %116 = arith.mulf %115, %114 : vector<8x384xf32>
    %cst_32 = arith.constant 5.000000e-01 : f32
    %117 = vector.broadcast %cst_32 : f32 to vector<8x384xf32>
    %118 = arith.addf %116, %117 : vector<8x384xf32>
    %119 = vector.extract_strided_slice %110 {offsets = [0, 384], sizes = [8, 128], strides = [1, 1]} : vector<8x512xf32> to vector<8x128xf32>
    %120 = math.tanh %119 : vector<8x128xf32>
    %121 = vector.extract_strided_slice %118 {offsets = [0, 0], sizes = [8, 128], strides = [1, 1]} : vector<8x384xf32> to vector<8x128xf32>
    %122 = vector.extract_strided_slice %118 {offsets = [0, 128], sizes = [8, 128], strides = [1, 1]} : vector<8x384xf32> to vector<8x128xf32>
    %123 = vector.extract_strided_slice %118 {offsets = [0, 256], sizes = [8, 128], strides = [1, 1]} : vector<8x384xf32> to vector<8x128xf32>
    %124 = arith.mulf %122, %105 : vector<8x128xf32>
    %125 = arith.mulf %121, %120 : vector<8x128xf32>
    %126 = arith.addf %124, %125 : vector<8x128xf32>
    %127 = math.tanh %126 : vector<8x128xf32>
    %128 = arith.mulf %123, %127 : vector<8x128xf32>
    %c48 = arith.constant 48 : index
    %c0_33 = arith.constant 0 : index
    %129 = vector.load %arg0[%c48, %c0_33] : memref<112x512xf32, #tpu.memory_space<vmem>>, vector<8x512xf32>
    %cst_34 = arith.constant dense<0.000000e+00> : vector<8x512xf32>
    %130 = tpu.matmul %128, %0, %cst_34 {dimension_numbers = #tpu.dot_dimension_numbers<[1], [0], [0], [1], [0, 0, 1, 1], [], []>} : vector<8x128xf32>, vector<128x512xf32>, vector<8x512xf32> -> vector<8x512xf32>
    %131 = arith.addf %129, %130 : vector<8x512xf32>
    %132 = vector.extract_strided_slice %131 {offsets = [0, 0], sizes = [8, 384], strides = [1, 1]} : vector<8x512xf32> to vector<8x384xf32>
    %cst_35 = arith.constant 5.000000e-01 : f32
    %133 = vector.broadcast %cst_35 : f32 to vector<8x384xf32>
    %134 = arith.mulf %133, %132 : vector<8x384xf32>
    %135 = math.tanh %134 : vector<8x384xf32>
    %cst_36 = arith.constant 5.000000e-01 : f32
    %136 = vector.broadcast %cst_36 : f32 to vector<8x384xf32>
    %137 = arith.mulf %136, %135 : vector<8x384xf32>
    %cst_37 = arith.constant 5.000000e-01 : f32
    %138 = vector.broadcast %cst_37 : f32 to vector<8x384xf32>
    %139 = arith.addf %137, %138 : vector<8x384xf32>
    %140 = vector.extract_strided_slice %131 {offsets = [0, 384], sizes = [8, 128], strides = [1, 1]} : vector<8x512xf32> to vector<8x128xf32>
    %141 = math.tanh %140 : vector<8x128xf32>
    %142 = vector.extract_strided_slice %139 {offsets = [0, 0], sizes = [8, 128], strides = [1, 1]} : vector<8x384xf32> to vector<8x128xf32>
    %143 = vector.extract_strided_slice %139 {offsets = [0, 128], sizes = [8, 128], strides = [1, 1]} : vector<8x384xf32> to vector<8x128xf32>
    %144 = vector.extract_strided_slice %139 {offsets = [0, 256], sizes = [8, 128], strides = [1, 1]} : vector<8x384xf32> to vector<8x128xf32>
    %145 = arith.mulf %143, %126 : vector<8x128xf32>
    %146 = arith.mulf %142, %141 : vector<8x128xf32>
    %147 = arith.addf %145, %146 : vector<8x128xf32>
    %148 = math.tanh %147 : vector<8x128xf32>
    %149 = arith.mulf %144, %148 : vector<8x128xf32>
    %c56 = arith.constant 56 : index
    %c0_38 = arith.constant 0 : index
    %150 = vector.load %arg0[%c56, %c0_38] : memref<112x512xf32, #tpu.memory_space<vmem>>, vector<8x512xf32>
    %cst_39 = arith.constant dense<0.000000e+00> : vector<8x512xf32>
    %151 = tpu.matmul %149, %0, %cst_39 {dimension_numbers = #tpu.dot_dimension_numbers<[1], [0], [0], [1], [0, 0, 1, 1], [], []>} : vector<8x128xf32>, vector<128x512xf32>, vector<8x512xf32> -> vector<8x512xf32>
    %152 = arith.addf %150, %151 : vector<8x512xf32>
    %153 = vector.extract_strided_slice %152 {offsets = [0, 0], sizes = [8, 384], strides = [1, 1]} : vector<8x512xf32> to vector<8x384xf32>
    %cst_40 = arith.constant 5.000000e-01 : f32
    %154 = vector.broadcast %cst_40 : f32 to vector<8x384xf32>
    %155 = arith.mulf %154, %153 : vector<8x384xf32>
    %156 = math.tanh %155 : vector<8x384xf32>
    %cst_41 = arith.constant 5.000000e-01 : f32
    %157 = vector.broadcast %cst_41 : f32 to vector<8x384xf32>
    %158 = arith.mulf %157, %156 : vector<8x384xf32>
    %cst_42 = arith.constant 5.000000e-01 : f32
    %159 = vector.broadcast %cst_42 : f32 to vector<8x384xf32>
    %160 = arith.addf %158, %159 : vector<8x384xf32>
    %161 = vector.extract_strided_slice %152 {offsets = [0, 384], sizes = [8, 128], strides = [1, 1]} : vector<8x512xf32> to vector<8x128xf32>
    %162 = math.tanh %161 : vector<8x128xf32>
    %163 = vector.extract_strided_slice %160 {offsets = [0, 0], sizes = [8, 128], strides = [1, 1]} : vector<8x384xf32> to vector<8x128xf32>
    %164 = vector.extract_strided_slice %160 {offsets = [0, 128], sizes = [8, 128], strides = [1, 1]} : vector<8x384xf32> to vector<8x128xf32>
    %165 = vector.extract_strided_slice %160 {offsets = [0, 256], sizes = [8, 128], strides = [1, 1]} : vector<8x384xf32> to vector<8x128xf32>
    %166 = arith.mulf %164, %147 : vector<8x128xf32>
    %167 = arith.mulf %163, %162 : vector<8x128xf32>
    %168 = arith.addf %166, %167 : vector<8x128xf32>
    %169 = math.tanh %168 : vector<8x128xf32>
    %170 = arith.mulf %165, %169 : vector<8x128xf32>
    %c64 = arith.constant 64 : index
    %c0_43 = arith.constant 0 : index
    %171 = vector.load %arg0[%c64, %c0_43] : memref<112x512xf32, #tpu.memory_space<vmem>>, vector<8x512xf32>
    %cst_44 = arith.constant dense<0.000000e+00> : vector<8x512xf32>
    %172 = tpu.matmul %170, %0, %cst_44 {dimension_numbers = #tpu.dot_dimension_numbers<[1], [0], [0], [1], [0, 0, 1, 1], [], []>} : vector<8x128xf32>, vector<128x512xf32>, vector<8x512xf32> -> vector<8x512xf32>
    %173 = arith.addf %171, %172 : vector<8x512xf32>
    %174 = vector.extract_strided_slice %173 {offsets = [0, 0], sizes = [8, 384], strides = [1, 1]} : vector<8x512xf32> to vector<8x384xf32>
    %cst_45 = arith.constant 5.000000e-01 : f32
    %175 = vector.broadcast %cst_45 : f32 to vector<8x384xf32>
    %176 = arith.mulf %175, %174 : vector<8x384xf32>
    %177 = math.tanh %176 : vector<8x384xf32>
    %cst_46 = arith.constant 5.000000e-01 : f32
    %178 = vector.broadcast %cst_46 : f32 to vector<8x384xf32>
    %179 = arith.mulf %178, %177 : vector<8x384xf32>
    %cst_47 = arith.constant 5.000000e-01 : f32
    %180 = vector.broadcast %cst_47 : f32 to vector<8x384xf32>
    %181 = arith.addf %179, %180 : vector<8x384xf32>
    %182 = vector.extract_strided_slice %173 {offsets = [0, 384], sizes = [8, 128], strides = [1, 1]} : vector<8x512xf32> to vector<8x128xf32>
    %183 = math.tanh %182 : vector<8x128xf32>
    %184 = vector.extract_strided_slice %181 {offsets = [0, 0], sizes = [8, 128], strides = [1, 1]} : vector<8x384xf32> to vector<8x128xf32>
    %185 = vector.extract_strided_slice %181 {offsets = [0, 128], sizes = [8, 128], strides = [1, 1]} : vector<8x384xf32> to vector<8x128xf32>
    %186 = vector.extract_strided_slice %181 {offsets = [0, 256], sizes = [8, 128], strides = [1, 1]} : vector<8x384xf32> to vector<8x128xf32>
    %187 = arith.mulf %185, %168 : vector<8x128xf32>
    %188 = arith.mulf %184, %183 : vector<8x128xf32>
    %189 = arith.addf %187, %188 : vector<8x128xf32>
    %190 = math.tanh %189 : vector<8x128xf32>
    %191 = arith.mulf %186, %190 : vector<8x128xf32>
    %c72 = arith.constant 72 : index
    %c0_48 = arith.constant 0 : index
    %192 = vector.load %arg0[%c72, %c0_48] : memref<112x512xf32, #tpu.memory_space<vmem>>, vector<8x512xf32>
    %cst_49 = arith.constant dense<0.000000e+00> : vector<8x512xf32>
    %193 = tpu.matmul %191, %0, %cst_49 {dimension_numbers = #tpu.dot_dimension_numbers<[1], [0], [0], [1], [0, 0, 1, 1], [], []>} : vector<8x128xf32>, vector<128x512xf32>, vector<8x512xf32> -> vector<8x512xf32>
    %194 = arith.addf %192, %193 : vector<8x512xf32>
    %195 = vector.extract_strided_slice %194 {offsets = [0, 0], sizes = [8, 384], strides = [1, 1]} : vector<8x512xf32> to vector<8x384xf32>
    %cst_50 = arith.constant 5.000000e-01 : f32
    %196 = vector.broadcast %cst_50 : f32 to vector<8x384xf32>
    %197 = arith.mulf %196, %195 : vector<8x384xf32>
    %198 = math.tanh %197 : vector<8x384xf32>
    %cst_51 = arith.constant 5.000000e-01 : f32
    %199 = vector.broadcast %cst_51 : f32 to vector<8x384xf32>
    %200 = arith.mulf %199, %198 : vector<8x384xf32>
    %cst_52 = arith.constant 5.000000e-01 : f32
    %201 = vector.broadcast %cst_52 : f32 to vector<8x384xf32>
    %202 = arith.addf %200, %201 : vector<8x384xf32>
    %203 = vector.extract_strided_slice %194 {offsets = [0, 384], sizes = [8, 128], strides = [1, 1]} : vector<8x512xf32> to vector<8x128xf32>
    %204 = math.tanh %203 : vector<8x128xf32>
    %205 = vector.extract_strided_slice %202 {offsets = [0, 0], sizes = [8, 128], strides = [1, 1]} : vector<8x384xf32> to vector<8x128xf32>
    %206 = vector.extract_strided_slice %202 {offsets = [0, 128], sizes = [8, 128], strides = [1, 1]} : vector<8x384xf32> to vector<8x128xf32>
    %207 = vector.extract_strided_slice %202 {offsets = [0, 256], sizes = [8, 128], strides = [1, 1]} : vector<8x384xf32> to vector<8x128xf32>
    %208 = arith.mulf %206, %189 : vector<8x128xf32>
    %209 = arith.mulf %205, %204 : vector<8x128xf32>
    %210 = arith.addf %208, %209 : vector<8x128xf32>
    %211 = math.tanh %210 : vector<8x128xf32>
    %212 = arith.mulf %207, %211 : vector<8x128xf32>
    %c80 = arith.constant 80 : index
    %c0_53 = arith.constant 0 : index
    %213 = vector.load %arg0[%c80, %c0_53] : memref<112x512xf32, #tpu.memory_space<vmem>>, vector<8x512xf32>
    %cst_54 = arith.constant dense<0.000000e+00> : vector<8x512xf32>
    %214 = tpu.matmul %212, %0, %cst_54 {dimension_numbers = #tpu.dot_dimension_numbers<[1], [0], [0], [1], [0, 0, 1, 1], [], []>} : vector<8x128xf32>, vector<128x512xf32>, vector<8x512xf32> -> vector<8x512xf32>
    %215 = arith.addf %213, %214 : vector<8x512xf32>
    %216 = vector.extract_strided_slice %215 {offsets = [0, 0], sizes = [8, 384], strides = [1, 1]} : vector<8x512xf32> to vector<8x384xf32>
    %cst_55 = arith.constant 5.000000e-01 : f32
    %217 = vector.broadcast %cst_55 : f32 to vector<8x384xf32>
    %218 = arith.mulf %217, %216 : vector<8x384xf32>
    %219 = math.tanh %218 : vector<8x384xf32>
    %cst_56 = arith.constant 5.000000e-01 : f32
    %220 = vector.broadcast %cst_56 : f32 to vector<8x384xf32>
    %221 = arith.mulf %220, %219 : vector<8x384xf32>
    %cst_57 = arith.constant 5.000000e-01 : f32
    %222 = vector.broadcast %cst_57 : f32 to vector<8x384xf32>
    %223 = arith.addf %221, %222 : vector<8x384xf32>
    %224 = vector.extract_strided_slice %215 {offsets = [0, 384], sizes = [8, 128], strides = [1, 1]} : vector<8x512xf32> to vector<8x128xf32>
    %225 = math.tanh %224 : vector<8x128xf32>
    %226 = vector.extract_strided_slice %223 {offsets = [0, 0], sizes = [8, 128], strides = [1, 1]} : vector<8x384xf32> to vector<8x128xf32>
    %227 = vector.extract_strided_slice %223 {offsets = [0, 128], sizes = [8, 128], strides = [1, 1]} : vector<8x384xf32> to vector<8x128xf32>
    %228 = vector.extract_strided_slice %223 {offsets = [0, 256], sizes = [8, 128], strides = [1, 1]} : vector<8x384xf32> to vector<8x128xf32>
    %229 = arith.mulf %227, %210 : vector<8x128xf32>
    %230 = arith.mulf %226, %225 : vector<8x128xf32>
    %231 = arith.addf %229, %230 : vector<8x128xf32>
    %232 = math.tanh %231 : vector<8x128xf32>
    %233 = arith.mulf %228, %232 : vector<8x128xf32>
    %c88 = arith.constant 88 : index
    %c0_58 = arith.constant 0 : index
    %234 = vector.load %arg0[%c88, %c0_58] : memref<112x512xf32, #tpu.memory_space<vmem>>, vector<8x512xf32>
    %cst_59 = arith.constant dense<0.000000e+00> : vector<8x512xf32>
    %235 = tpu.matmul %233, %0, %cst_59 {dimension_numbers = #tpu.dot_dimension_numbers<[1], [0], [0], [1], [0, 0, 1, 1], [], []>} : vector<8x128xf32>, vector<128x512xf32>, vector<8x512xf32> -> vector<8x512xf32>
    %236 = arith.addf %234, %235 : vector<8x512xf32>
    %237 = vector.extract_strided_slice %236 {offsets = [0, 0], sizes = [8, 384], strides = [1, 1]} : vector<8x512xf32> to vector<8x384xf32>
    %cst_60 = arith.constant 5.000000e-01 : f32
    %238 = vector.broadcast %cst_60 : f32 to vector<8x384xf32>
    %239 = arith.mulf %238, %237 : vector<8x384xf32>
    %240 = math.tanh %239 : vector<8x384xf32>
    %cst_61 = arith.constant 5.000000e-01 : f32
    %241 = vector.broadcast %cst_61 : f32 to vector<8x384xf32>
    %242 = arith.mulf %241, %240 : vector<8x384xf32>
    %cst_62 = arith.constant 5.000000e-01 : f32
    %243 = vector.broadcast %cst_62 : f32 to vector<8x384xf32>
    %244 = arith.addf %242, %243 : vector<8x384xf32>
    %245 = vector.extract_strided_slice %236 {offsets = [0, 384], sizes = [8, 128], strides = [1, 1]} : vector<8x512xf32> to vector<8x128xf32>
    %246 = math.tanh %245 : vector<8x128xf32>
    %247 = vector.extract_strided_slice %244 {offsets = [0, 0], sizes = [8, 128], strides = [1, 1]} : vector<8x384xf32> to vector<8x128xf32>
    %248 = vector.extract_strided_slice %244 {offsets = [0, 128], sizes = [8, 128], strides = [1, 1]} : vector<8x384xf32> to vector<8x128xf32>
    %249 = vector.extract_strided_slice %244 {offsets = [0, 256], sizes = [8, 128], strides = [1, 1]} : vector<8x384xf32> to vector<8x128xf32>
    %250 = arith.mulf %248, %231 : vector<8x128xf32>
    %251 = arith.mulf %247, %246 : vector<8x128xf32>
    %252 = arith.addf %250, %251 : vector<8x128xf32>
    %253 = math.tanh %252 : vector<8x128xf32>
    %254 = arith.mulf %249, %253 : vector<8x128xf32>
    %c96 = arith.constant 96 : index
    %c0_63 = arith.constant 0 : index
    %255 = vector.load %arg0[%c96, %c0_63] : memref<112x512xf32, #tpu.memory_space<vmem>>, vector<8x512xf32>
    %cst_64 = arith.constant dense<0.000000e+00> : vector<8x512xf32>
    %256 = tpu.matmul %254, %0, %cst_64 {dimension_numbers = #tpu.dot_dimension_numbers<[1], [0], [0], [1], [0, 0, 1, 1], [], []>} : vector<8x128xf32>, vector<128x512xf32>, vector<8x512xf32> -> vector<8x512xf32>
    %257 = arith.addf %255, %256 : vector<8x512xf32>
    %258 = vector.extract_strided_slice %257 {offsets = [0, 0], sizes = [8, 384], strides = [1, 1]} : vector<8x512xf32> to vector<8x384xf32>
    %cst_65 = arith.constant 5.000000e-01 : f32
    %259 = vector.broadcast %cst_65 : f32 to vector<8x384xf32>
    %260 = arith.mulf %259, %258 : vector<8x384xf32>
    %261 = math.tanh %260 : vector<8x384xf32>
    %cst_66 = arith.constant 5.000000e-01 : f32
    %262 = vector.broadcast %cst_66 : f32 to vector<8x384xf32>
    %263 = arith.mulf %262, %261 : vector<8x384xf32>
    %cst_67 = arith.constant 5.000000e-01 : f32
    %264 = vector.broadcast %cst_67 : f32 to vector<8x384xf32>
    %265 = arith.addf %263, %264 : vector<8x384xf32>
    %266 = vector.extract_strided_slice %257 {offsets = [0, 384], sizes = [8, 128], strides = [1, 1]} : vector<8x512xf32> to vector<8x128xf32>
    %267 = math.tanh %266 : vector<8x128xf32>
    %268 = vector.extract_strided_slice %265 {offsets = [0, 0], sizes = [8, 128], strides = [1, 1]} : vector<8x384xf32> to vector<8x128xf32>
    %269 = vector.extract_strided_slice %265 {offsets = [0, 128], sizes = [8, 128], strides = [1, 1]} : vector<8x384xf32> to vector<8x128xf32>
    %270 = vector.extract_strided_slice %265 {offsets = [0, 256], sizes = [8, 128], strides = [1, 1]} : vector<8x384xf32> to vector<8x128xf32>
    %271 = arith.mulf %269, %252 : vector<8x128xf32>
    %272 = arith.mulf %268, %267 : vector<8x128xf32>
    %273 = arith.addf %271, %272 : vector<8x128xf32>
    %274 = math.tanh %273 : vector<8x128xf32>
    %275 = arith.mulf %270, %274 : vector<8x128xf32>
    %c104 = arith.constant 104 : index
    %c0_68 = arith.constant 0 : index
    %276 = vector.load %arg0[%c104, %c0_68] : memref<112x512xf32, #tpu.memory_space<vmem>>, vector<8x512xf32>
    %cst_69 = arith.constant dense<0.000000e+00> : vector<8x512xf32>
    %277 = tpu.matmul %275, %0, %cst_69 {dimension_numbers = #tpu.dot_dimension_numbers<[1], [0], [0], [1], [0, 0, 1, 1], [], []>} : vector<8x128xf32>, vector<128x512xf32>, vector<8x512xf32> -> vector<8x512xf32>
    %278 = arith.addf %276, %277 : vector<8x512xf32>
    %279 = vector.extract_strided_slice %278 {offsets = [0, 0], sizes = [8, 384], strides = [1, 1]} : vector<8x512xf32> to vector<8x384xf32>
    %cst_70 = arith.constant 5.000000e-01 : f32
    %280 = vector.broadcast %cst_70 : f32 to vector<8x384xf32>
    %281 = arith.mulf %280, %279 : vector<8x384xf32>
    %282 = math.tanh %281 : vector<8x384xf32>
    %cst_71 = arith.constant 5.000000e-01 : f32
    %283 = vector.broadcast %cst_71 : f32 to vector<8x384xf32>
    %284 = arith.mulf %283, %282 : vector<8x384xf32>
    %cst_72 = arith.constant 5.000000e-01 : f32
    %285 = vector.broadcast %cst_72 : f32 to vector<8x384xf32>
    %286 = arith.addf %284, %285 : vector<8x384xf32>
    %287 = vector.extract_strided_slice %278 {offsets = [0, 384], sizes = [8, 128], strides = [1, 1]} : vector<8x512xf32> to vector<8x128xf32>
    %288 = math.tanh %287 : vector<8x128xf32>
    %289 = vector.extract_strided_slice %286 {offsets = [0, 0], sizes = [8, 128], strides = [1, 1]} : vector<8x384xf32> to vector<8x128xf32>
    %290 = vector.extract_strided_slice %286 {offsets = [0, 128], sizes = [8, 128], strides = [1, 1]} : vector<8x384xf32> to vector<8x128xf32>
    %291 = vector.extract_strided_slice %286 {offsets = [0, 256], sizes = [8, 128], strides = [1, 1]} : vector<8x384xf32> to vector<8x128xf32>
    %292 = arith.mulf %290, %273 : vector<8x128xf32>
    %293 = arith.mulf %289, %288 : vector<8x128xf32>
    %294 = arith.addf %292, %293 : vector<8x128xf32>
    %295 = math.tanh %294 : vector<8x128xf32>
    %296 = arith.mulf %291, %295 : vector<8x128xf32>
    %c0_73 = arith.constant 0 : index
    %c0_74 = arith.constant 0 : index
    %297 = vector.load %arg2[%c0_73, %c0_74] : memref<1x128xf32, #tpu.memory_space<vmem>>, vector<1x128xf32>
    %298 = vector.broadcast %297 : vector<1x128xf32> to vector<8x128xf32>
    %299 = arith.mulf %296, %298 : vector<8x128xf32>
    %cst_75 = arith.constant dense<0.000000e+00> : vector<8xf32>
    %300 = vector.multi_reduction <add>, %299, %cst_75 [1] : vector<8x128xf32> to vector<8xf32>
    %301 = vector.shape_cast %300 : vector<8xf32> to vector<8x1xf32>
    %c0_76 = arith.constant 0 : index
    %c0_77 = arith.constant 0 : index
    %302 = vector.load %arg3[%c0_76, %c0_77] : memref<1x1xf32, #tpu.memory_space<vmem>>, vector<1x1xf32>
    %303 = vector.broadcast %302 : vector<1x1xf32> to vector<8x1xf32>
    %304 = arith.addf %301, %303 : vector<8x1xf32>
    %c0_78 = arith.constant 0 : index
    %c0_79 = arith.constant 0 : index
    %305 = vector.load %arg4[%c0_78, %c0_79] : memref<8x1xf32, #tpu.memory_space<vmem>>, vector<8x1xf32>
    tpu.vector_store %arg4[%c0_78, %c0_79], %304 {strides = array<i32>} : memref<8x1xf32, #tpu.memory_space<vmem>>, vector<8x1xf32>,
    return
  }
}

</mosaic_0001>

<llo_original>
// kernel: sumo_nn_forward.1
$region0: #{sumo_nn_forward.1}
  #allocation0 [shape = 'u32[]', space=smem, size = 0x4, offset = 0x4, fixed_abs, tag = 'smem constant byte address 0x4 - core index']
  #allocation1 [shape = 'u32[144,128]{1,0:T(1,128)}', space=vmem, size = 0x12000, scoped, tag = 'internal scratch']
  #allocation2 [shape = 'f32[1,1]{1,0:T(1,128)S(1)}', space=vmem, size = 0x200, scoped, tag = 'scoped memory for sumo_nn_forward.1']
  %s0 = inlined_call_operand.vmem [shape: f32[112,512], index: 0, kind: input, shape index: {}]
  %s1 = inlined_call_operand.vmem [shape: f32[128,512], index: 1, kind: input, shape index: {}]
  %s2 = inlined_call_operand.vmem [shape: f32[1,128], index: 2, kind: input, shape index: {}]
  %s3 = inlined_call_operand.<no memory space> [shape: f32[1,1], index: 3, kind: input, shape index: {}]
  %s4 = inlined_call_operand.vmem [shape: f32[8,1], index: 4, kind: output, shape index: {}]
  %s5 = sld [smem:[#allocation0]]
  $region26: #{sumo_nn_forward.1} parent=0
    _
  %s7 = ssub.s32 1, %s5
  %s8 = scalar_select 0, %s7, %s5
  %v9 = vstv %s3
  %10 = vst [vmem:[#allocation2] sm:$0x1] %v9
  // Predicated region
  $region2: #{sumo_nn_forward.1} parent=0 // pred_check
    _
  $region3: #{sumo_nn_forward.1} parent=0 // pred_check_branch
    %12 = sbr.rel (0) target = $region5
  $region4: #{sumo_nn_forward.1} parent=0 // pred_region
    _
  $region5: #{sumo_nn_forward.1} parent=0 // pred_fallthru
    _
  // Predicated region
  $region6: #{sumo_nn_forward.1} parent=0 // pred_check
    _
  $region7: #{sumo_nn_forward.1} parent=0 // pred_check_branch
    %14 = sbr.rel (0) target = $region9
  $region8: #{sumo_nn_forward.1} parent=0 // pred_region
    _
  $region9: #{sumo_nn_forward.1} parent=0 // pred_fallthru
    _
  // Predicated region
  $region10: #{sumo_nn_forward.1} parent=0 // pred_check
    _
  $region11: #{sumo_nn_forward.1} parent=0 // pred_check_branch
    %16 = sbr.rel (0) target = $region13
  $region12: #{sumo_nn_forward.1} parent=0 // pred_region
    _
  $region13: #{sumo_nn_forward.1} parent=0 // pred_fallthru
    _
  // Predicated region
  $region14: #{sumo_nn_forward.1} parent=0 // pred_check
    _
  $region15: #{sumo_nn_forward.1} parent=0 // pred_check_branch
    %18 = sbr.rel (0) target = $region17
  $region16: #{sumo_nn_forward.1} parent=0 // pred_region
    _
  $region17: #{sumo_nn_forward.1} parent=0 // pred_fallthru
    _
  %v19 = vld [vmem:[%s1] sm:$0xff]
  %v20 = vld [vmem:[%s1 + $0x8] sm:$0xff]
  %v21 = vld [vmem:[%s1 + $0x10] sm:$0xff]
  %v22 = vld [vmem:[%s1 + $0x18] sm:$0xff]
  %v23 = vld [vmem:[%s1 + $0x20] sm:$0xff]
  %v24 = vld [vmem:[%s1 + $0x28] sm:$0xff]
  %v25 = vld [vmem:[%s1 + $0x30] sm:$0xff]
  %v26 = vld [vmem:[%s1 + $0x38] sm:$0xff]
  %v27 = vld [vmem:[%s1 + $0x40] sm:$0xff]
  %v28 = vld [vmem:[%s1 + $0x48] sm:$0xff]
  %v29 = vld [vmem:[%s1 + $0x50] sm:$0xff]
  %v30 = vld [vmem:[%s1 + $0x58] sm:$0xff]
  %v31 = vld [vmem:[%s1 + $0x60] sm:$0xff]
  %v32 = vld [vmem:[%s1 + $0x68] sm:$0xff]
  %v33 = vld [vmem:[%s1 + $0x70] sm:$0xff]
  %v34 = vld [vmem:[%s1 + $0x78] sm:$0xff]
  %v35 = vld [vmem:[%s1 + $0x80] sm:$0xff]
  %v36 = vld [vmem:[%s1 + $0x88] sm:$0xff]
  %v37 = vld [vmem:[%s1 + $0x90] sm:$0xff]
  %v38 = vld [vmem:[%s1 + $0x98] sm:$0xff]
  %v39 = vld [vmem:[%s1 + $0xa0] sm:$0xff]
  %v40 = vld [vmem:[%s1 + $0xa8] sm:$0xff]
  %v41 = vld [vmem:[%s1 + $0xb0] sm:$0xff]
  %v42 = vld [vmem:[%s1 + $0xb8] sm:$0xff]
  %v43 = vld [vmem:[%s1 + $0xc0] sm:$0xff]
  %v44 = vld [vmem:[%s1 + $0xc8] sm:$0xff]
  %v45 = vld [vmem:[%s1 + $0xd0] sm:$0xff]
  %v46 = vld [vmem:[%s1 + $0xd8] sm:$0xff]
  %v47 = vld [vmem:[%s1 + $0xe0] sm:$0xff]
  %v48 = vld [vmem:[%s1 + $0xe8] sm:$0xff]
  %v49 = vld [vmem:[%s1 + $0xf0] sm:$0xff]
  %v50 = vld [vmem:[%s1 + $0xf8] sm:$0xff]
  %v51 = vld [vmem:[%s1 + $0x100] sm:$0xff]
  %v52 = vld [vmem:[%s1 + $0x108] sm:$0xff]
  %v53 = vld [vmem:[%s1 + $0x110] sm:$0xff]
  %v54 = vld [vmem:[%s1 + $0x118] sm:$0xff]
  %v55 = vld [vmem:[%s1 + $0x120] sm:$0xff]
  %v56 = vld [vmem:[%s1 + $0x128] sm:$0xff]
  %v57 = vld [vmem:[%s1 + $0x130] sm:$0xff]
  %v58 = vld [vmem:[%s1 + $0x138] sm:$0xff]
  %v59 = vld [vmem:[%s1 + $0x140] sm:$0xff]
  %v60 = vld [vmem:[%s1 + $0x148] sm:$0xff]
  %v61 = vld [vmem:[%s1 + $0x150] sm:$0xff]
  %v62 = vld [vmem:[%s1 + $0x158] sm:$0xff]
  %v63 = vld [vmem:[%s1 + $0x160] sm:$0xff]
  %v64 = vld [vmem:[%s1 + $0x168] sm:$0xff]
  %v65 = vld [vmem:[%s1 + $0x170] sm:$0xff]
  %v66 = vld [vmem:[%s1 + $0x178] sm:$0xff]
  %v67 = vld [vmem:[%s1 + $0x180] sm:$0xff]
  %v68 = vld [vmem:[%s1 + $0x188] sm:$0xff]
  %v69 = vld [vmem:[%s1 + $0x190] sm:$0xff]
  %v70 = vld [vmem:[%s1 + $0x198] sm:$0xff]
  %v71 = vld [vmem:[%s1 + $0x1a0] sm:$0xff]
  %v72 = vld [vmem:[%s1 + $0x1a8] sm:$0xff]
  %v73 = vld [vmem:[%s1 + $0x1b0] sm:$0xff]
  %v74 = vld [vmem:[%s1 + $0x1b8] sm:$0xff]
  %v75 = vld [vmem:[%s1 + $0x1c0] sm:$0xff]
  %v76 = vld [vmem:[%s1 + $0x1c8] sm:$0xff]
  %v77 = vld [vmem:[%s1 + $0x1d0] sm:$0xff]
  %v78 = vld [vmem:[%s1 + $0x1d8] sm:$0xff]
  %v79 = vld [vmem:[%s1 + $0x1e0] sm:$0xff]
  %v80 = vld [vmem:[%s1 + $0x1e8] sm:$0xff]
  %v81 = vld [vmem:[%s1 + $0x1f0] sm:$0xff]
  %v82 = vld [vmem:[%s1 + $0x1f8] sm:$0xff]
  %v83 = vld [vmem:[%s0] sm:$0xff]
  %v84 = vld [vmem:[%s0 + $0x8] sm:$0xff]
  %v85 = vld [vmem:[%s0 + $0x10] sm:$0xff]
  %v86 = vld [vmem:[%s0 + $0x18] sm:$0xff]
  %87 = vmatprep.subr.mxu0 %v20
  %88 = vmatpush1.msra.mxu0 %v19
  %89 = vmatprep.subr.mxu0 %v24
  %90 = vmatpush1.msra.mxu0 %v23
  %91 = vmatprep.subr.mxu0 %v28
  %92 = vmatpush1.msra.mxu0 %v27
  %93 = vmatprep.subr.mxu0 %v32
  %94 = vmatpush1.msra.mxu0 %v31
  %95 = vmatprep.subr.mxu0 %v36
  %96 = vmatpush1.msra.mxu0 %v35
  %97 = vmatprep.subr.mxu0 %v40
  %98 = vmatpush1.msra.mxu0 %v39
  %99 = vmatprep.subr.mxu0 %v44
  %100 = vmatpush1.msra.mxu0 %v43
  %101 = vmatprep.subr.mxu0 %v48
  %102 = vmatpush1.msra.mxu0 %v47
  %103 = vmatprep.subr.mxu0 %v52
  %104 = vmatpush1.msra.mxu0 %v51
  %105 = vmatprep.subr.mxu0 %v56
  %106 = vmatpush1.msra.mxu0 %v55
  %107 = vmatprep.subr.mxu0 %v60
  %108 = vmatpush1.msra.mxu0 %v59
  %109 = vmatprep.subr.mxu0 %v64
  %110 = vmatpush1.msra.mxu0 %v63
  %111 = vmatprep.subr.mxu0 %v68
  %112 = vmatpush1.msra.mxu0 %v67
  %113 = vmatprep.subr.mxu0 %v72
  %114 = vmatpush1.msra.mxu0 %v71
  %115 = vmatprep.subr.mxu0 %v76
  %116 = vmatpush1.msra.mxu0 %v75
  %117 = vmatprep.subr.mxu0 %v80
  %118 = vmatpush1.msra.mxu0 %v79
  %119 = vmatprep.subr.mxu0 0.0
  %120 = vmatpush1.msra.mxu0 0.0
  %121 = vmatprep.subr.mxu0 0.0
  %122 = vmatpush1.msra.mxu0 0.0
  %123 = vmatprep.subr.mxu0 0.0
  %124 = vmatpush1.msra.mxu0 0.0
  %125 = vmatprep.subr.mxu0 0.0
  %126 = vmatpush1.msra.mxu0 0.0
  %127 = vmatprep.subr.mxu0 0.0
  %128 = vmatpush1.msra.mxu0 0.0
  %129 = vmatprep.subr.mxu0 0.0
  %130 = vmatpush1.msra.mxu0 0.0
  %131 = vmatprep.subr.mxu0 0.0
  %132 = vmatpush1.msra.mxu0 0.0
  %133 = vmatprep.subr.mxu0 0.0
  %134 = vmatpush1.msra.mxu0 0.0
  %135 = vmatprep.subr.mxu0 0.0
  %136 = vmatpush1.msra.mxu0 0.0
  %137 = vmatprep.subr.mxu0 0.0
  %138 = vmatpush1.msra.mxu0 0.0
  %139 = vmatprep.subr.mxu0 0.0
  %140 = vmatpush1.msra.mxu0 0.0
  %141 = vmatprep.subr.mxu0 0.0
  %142 = vmatpush1.msra.mxu0 0.0
  %143 = vmatprep.subr.mxu0 0.0
  %144 = vmatpush1.msra.mxu0 0.0
  %145 = vmatprep.subr.mxu0 0.0
  %146 = vmatpush1.msra.mxu0 0.0
  %147 = vmatprep.subr.mxu0 0.0
  %148 = vmatpush1.msra.mxu0 0.0
  %149 = vmatprep.subr.mxu0 0.0
  %150 = vmatpush1.msra.mxu0 0.0
  %151 = vmatprep.mubr.f32.mxu0 0.0
  %152 = vmatmul.mubr.f32.gmra.mrb[0].mxu0 0.0
  %v153 = vpop.f32.mrb[0].mxu0
  %v154 = vadd.f32 0.0, %v153
  %v155 = vpop.f32.mrb[0].mxu0
  %v156 = vadd.f32 0.0, %v155
  %157 = vdwg.mxu0
  %158 = vmatprep.subr.mxu0 %v22
  %159 = vmatpush1.msra.mxu0 %v21
  %160 = vmatprep.subr.mxu0 %v26
  %161 = vmatpush1.msra.mxu0 %v25
  %162 = vmatprep.subr.mxu0 %v30
  %163 = vmatpush1.msra.mxu0 %v29
  %164 = vmatprep.subr.mxu0 %v34
  %165 = vmatpush1.msra.mxu0 %v33
  %166 = vmatprep.subr.mxu0 %v38
  %167 = vmatpush1.msra.mxu0 %v37
  %168 = vmatprep.subr.mxu0 %v42
  %169 = vmatpush1.msra.mxu0 %v41
  %170 = vmatprep.subr.mxu0 %v46
  %171 = vmatpush1.msra.mxu0 %v45
  %172 = vmatprep.subr.mxu0 %v50
  %173 = vmatpush1.msra.mxu0 %v49
  %174 = vmatprep.subr.mxu0 %v54
  %175 = vmatpush1.msra.mxu0 %v53
  %176 = vmatprep.subr.mxu0 %v58
  %177 = vmatpush1.msra.mxu0 %v57
  %178 = vmatprep.subr.mxu0 %v62
  %179 = vmatpush1.msra.mxu0 %v61
  %180 = vmatprep.subr.mxu0 %v66
  %181 = vmatpush1.msra.mxu0 %v65
  %182 = vmatprep.subr.mxu0 %v70
  %183 = vmatpush1.msra.mxu0 %v69
  %184 = vmatprep.subr.mxu0 %v74
  %185 = vmatpush1.msra.mxu0 %v73
  %186 = vmatprep.subr.mxu0 %v78
  %187 = vmatpush1.msra.mxu0 %v77
  %188 = vmatprep.subr.mxu0 %v82
  %189 = vmatpush1.msra.mxu0 %v81
  %190 = vmatprep.subr.mxu0 0.0
  %191 = vmatpush1.msra.mxu0 0.0
  %192 = vmatprep.subr.mxu0 0.0
  %193 = vmatpush1.msra.mxu0 0.0
  %194 = vmatprep.subr.mxu0 0.0
  %195 = vmatpush1.msra.mxu0 0.0
  %196 = vmatprep.subr.mxu0 0.0
  %197 = vmatpush1.msra.mxu0 0.0
  %198 = vmatprep.subr.mxu0 0.0
  %199 = vmatpush1.msra.mxu0 0.0
  %200 = vmatprep.subr.mxu0 0.0
  %201 = vmatpush1.msra.mxu0 0.0
  %202 = vmatprep.subr.mxu0 0.0
  %203 = vmatpush1.msra.mxu0 0.0
  %204 = vmatprep.subr.mxu0 0.0
  %205 = vmatpush1.msra.mxu0 0.0
  %206 = vmatprep.subr.mxu0 0.0
  %207 = vmatpush1.msra.mxu0 0.0
  %208 = vmatprep.subr.mxu0 0.0
  %209 = vmatpush1.msra.mxu0 0.0
  %210 = vmatprep.subr.mxu0 0.0
  %211 = vmatpush1.msra.mxu0 0.0
  %212 = vmatprep.subr.mxu0 0.0
  %213 = vmatpush1.msra.mxu0 0.0
  %214 = vmatprep.subr.mxu0 0.0
  %215 = vmatpush1.msra.mxu0 0.0
  %216 = vmatprep.subr.mxu0 0.0
  %217 = vmatpush1.msra.mxu0 0.0
  %218 = vmatprep.subr.mxu0 0.0
  %219 = vmatpush1.msra.mxu0 0.0
  %220 = vmatprep.subr.mxu0 0.0
  %221 = vmatpush1.msra.mxu0 0.0
  %222 = vmatprep.mubr.f32.mxu0 0.0
  %223 = vmatmul.mubr.f32.gmra.mrb[0].mxu0 0.0
  %v224 = vpop.f32.mrb[0].mxu0
  %v225 = vadd.f32 0.0, %v224
  %v226 = vpop.f32.mrb[0].mxu0
  %v227 = vadd.f32 0.0, %v226
  %228 = vdwg.mxu0
  %v229 = vadd.f32 %v83, %v154
  %v230 = vadd.f32 %v84, %v156
  %v231 = vadd.f32 %v85, %v225
  %v232 = vadd.f32 %v86, %v227
  %v233 = vmul.f32 %v229, 0.5
  %v234 = vmul.f32 %v230, 0.5
  %v235 = vmul.f32 %v231, 0.5
  %v236 = vtanh.pop %v233
  %v237 = vtanh.pop %v234
  %v238 = vtanh.pop %v235
  %v239 = vmul.f32 %v236, 0.5
  %v240 = vmul.f32 %v237, 0.5
  %v241 = vmul.f32 %v238, 0.5
  %v242 = vadd.f32 %v239, 0.5
  %v243 = vadd.f32 %v240, 0.5
  %v244 = vadd.f32 %v241, 0.5
  %v245 = vtanh.pop %v232
  %v246 = vmul.f32 %v243, 0.0
  %v247 = vmul.f32 %v242, %v245
  %v248 = vadd.f32 %v246, %v247
  %v249 = vtanh.pop %v248
  %v250 = vmul.f32 %v244, %v249
  %v251 = vld [vmem:[%s0 + $0x20] sm:$0xff]
  %v252 = vld [vmem:[%s0 + $0x28] sm:$0xff]
  %v253 = vld [vmem:[%s0 + $0x30] sm:$0xff]
  %v254 = vld [vmem:[%s0 + $0x38] sm:$0xff]
  %255 = vmatprep.subr.mxu0 %v20
  %256 = vmatpush1.msra.mxu0 %v19
  %257 = vmatprep.subr.mxu0 %v24
  %258 = vmatpush1.msra.mxu0 %v23
  %259 = vmatprep.subr.mxu0 %v28
  %260 = vmatpush1.msra.mxu0 %v27
  %261 = vmatprep.subr.mxu0 %v32
  %262 = vmatpush1.msra.mxu0 %v31
  %263 = vmatprep.subr.mxu0 %v36
  %264 = vmatpush1.msra.mxu0 %v35
  %265 = vmatprep.subr.mxu0 %v40
  %266 = vmatpush1.msra.mxu0 %v39
  %267 = vmatprep.subr.mxu0 %v44
  %268 = vmatpush1.msra.mxu0 %v43
  %269 = vmatprep.subr.mxu0 %v48
  %270 = vmatpush1.msra.mxu0 %v47
  %271 = vmatprep.subr.mxu0 %v52
  %272 = vmatpush1.msra.mxu0 %v51
  %273 = vmatprep.subr.mxu0 %v56
  %274 = vmatpush1.msra.mxu0 %v55
  %275 = vmatprep.subr.mxu0 %v60
  %276 = vmatpush1.msra.mxu0 %v59
  %277 = vmatprep.subr.mxu0 %v64
  %278 = vmatpush1.msra.mxu0 %v63
  %279 = vmatprep.subr.mxu0 %v68
  %280 = vmatpush1.msra.mxu0 %v67
  %281 = vmatprep.subr.mxu0 %v72
  %282 = vmatpush1.msra.mxu0 %v71
  %283 = vmatprep.subr.mxu0 %v76
  %284 = vmatpush1.msra.mxu0 %v75
  %285 = vmatprep.subr.mxu0 %v80
  %286 = vmatpush1.msra.mxu0 %v79
  %287 = vmatprep.subr.mxu0 0.0
  %288 = vmatpush1.msra.mxu0 0.0
  %289 = vmatprep.subr.mxu0 0.0
  %290 = vmatpush1.msra.mxu0 0.0
  %291 = vmatprep.subr.mxu0 0.0
  %292 = vmatpush1.msra.mxu0 0.0
  %293 = vmatprep.subr.mxu0 0.0
  %294 = vmatpush1.msra.mxu0 0.0
  %295 = vmatprep.subr.mxu0 0.0
  %296 = vmatpush1.msra.mxu0 0.0
  %297 = vmatprep.subr.mxu0 0.0
  %298 = vmatpush1.msra.mxu0 0.0
  %299 = vmatprep.subr.mxu0 0.0
  %300 = vmatpush1.msra.mxu0 0.0
  %301 = vmatprep.subr.mxu0 0.0
  %302 = vmatpush1.msra.mxu0 0.0
  %303 = vmatprep.subr.mxu0 0.0
  %304 = vmatpush1.msra.mxu0 0.0
  %305 = vmatprep.subr.mxu0 0.0
  %306 = vmatpush1.msra.mxu0 0.0
  %307 = vmatprep.subr.mxu0 0.0
  %308 = vmatpush1.msra.mxu0 0.0
  %309 = vmatprep.subr.mxu0 0.0
  %310 = vmatpush1.msra.mxu0 0.0
  %311 = vmatprep.subr.mxu0 0.0
  %312 = vmatpush1.msra.mxu0 0.0
  %313 = vmatprep.subr.mxu0 0.0
  %314 = vmatpush1.msra.mxu0 0.0
  %315 = vmatprep.subr.mxu0 0.0
  %316 = vmatpush1.msra.mxu0 0.0
  %317 = vmatprep.subr.mxu0 0.0
  %318 = vmatpush1.msra.mxu0 0.0
  %319 = vmatprep.mubr.f32.mxu0 0.0
  %320 = vmatmul.mubr.f32.gmra.mrb[0].mxu0 %v250
  %v321 = vpop.f32.mrb[0].mxu0
  %v322 = vadd.f32 0.0, %v321
  %v323 = vpop.f32.mrb[0].mxu0
  %v324 = vadd.f32 0.0, %v323
  %325 = vdwg.mxu0
  %326 = vmatprep.subr.mxu0 %v22
  %327 = vmatpush1.msra.mxu0 %v21
  %328 = vmatprep.subr.mxu0 %v26
  %329 = vmatpush1.msra.mxu0 %v25
  %330 = vmatprep.subr.mxu0 %v30
  %331 = vmatpush1.msra.mxu0 %v29
  %332 = vmatprep.subr.mxu0 %v34
  %333 = vmatpush1.msra.mxu0 %v33
  %334 = vmatprep.subr.mxu0 %v38
  %335 = vmatpush1.msra.mxu0 %v37
  %336 = vmatprep.subr.mxu0 %v42
  %337 = vmatpush1.msra.mxu0 %v41
  %338 = vmatprep.subr.mxu0 %v46
  %339 = vmatpush1.msra.mxu0 %v45
  %340 = vmatprep.subr.mxu0 %v50
  %341 = vmatpush1.msra.mxu0 %v49
  %342 = vmatprep.subr.mxu0 %v54
  %343 = vmatpush1.msra.mxu0 %v53
  %344 = vmatprep.subr.mxu0 %v58
  %345 = vmatpush1.msra.mxu0 %v57
  %346 = vmatprep.subr.mxu0 %v62
  %347 = vmatpush1.msra.mxu0 %v61
  %348 = vmatprep.subr.mxu0 %v66
  %349 = vmatpush1.msra.mxu0 %v65
  %350 = vmatprep.subr.mxu0 %v70
  %351 = vmatpush1.msra.mxu0 %v69
  %352 = vmatprep.subr.mxu0 %v74
  %353 = vmatpush1.msra.mxu0 %v73
  %354 = vmatprep.subr.mxu0 %v78
  %355 = vmatpush1.msra.mxu0 %v77
  %356 = vmatprep.subr.mxu0 %v82
  %357 = vmatpush1.msra.mxu0 %v81
  %358 = vmatprep.subr.mxu0 0.0
  %359 = vmatpush1.msra.mxu0 0.0
  %360 = vmatprep.subr.mxu0 0.0
  %361 = vmatpush1.msra.mxu0 0.0
  %362 = vmatprep.subr.mxu0 0.0
  %363 = vmatpush1.msra.mxu0 0.0
  %364 = vmatprep.subr.mxu0 0.0
  %365 = vmatpush1.msra.mxu0 0.0
  %366 = vmatprep.subr.mxu0 0.0
  %367 = vmatpush1.msra.mxu0 0.0
  %368 = vmatprep.subr.mxu0 0.0
  %369 = vmatpush1.msra.mxu0 0.0
  %370 = vmatprep.subr.mxu0 0.0
  %371 = vmatpush1.msra.mxu0 0.0
  %372 = vmatprep.subr.mxu0 0.0
  %373 = vmatpush1.msra.mxu0 0.0
  %374 = vmatprep.subr.mxu0 0.0
  %375 = vmatpush1.msra.mxu0 0.0
  %376 = vmatprep.subr.mxu0 0.0
  %377 = vmatpush1.msra.mxu0 0.0
  %378 = vmatprep.subr.mxu0 0.0
  %379 = vmatpush1.msra.mxu0 0.0
  %380 = vmatprep.subr.mxu0 0.0
  %381 = vmatpush1.msra.mxu0 0.0
  %382 = vmatprep.subr.mxu0 0.0
  %383 = vmatpush1.msra.mxu0 0.0
  %384 = vmatprep.subr.mxu0 0.0
  %385 = vmatpush1.msra.mxu0 0.0
  %386 = vmatprep.subr.mxu0 0.0
  %387 = vmatpush1.msra.mxu0 0.0
  %388 = vmatprep.subr.mxu0 0.0
  %389 = vmatpush1.msra.mxu0 0.0
  %390 = vmatprep.mubr.f32.mxu0 0.0
  %391 = vmatmul.mubr.f32.gmra.mrb[0].mxu0 %v250
  %v392 = vpop.f32.mrb[0].mxu0
  %v393 = vadd.f32 0.0, %v392
  %v394 = vpop.f32.mrb[0].mxu0
  %v395 = vadd.f32 0.0, %v394
  %396 = vdwg.mxu0
  %v397 = vadd.f32 %v251, %v322
  %v398 = vadd.f32 %v252, %v324
  %v399 = vadd.f32 %v253, %v393
  %v400 = vadd.f32 %v254, %v395
  %v401 = vmul.f32 %v397, 0.5
  %v402 = vmul.f32 %v398, 0.5
  %v403 = vmul.f32 %v399, 0.5
  %v404 = vtanh.pop %v401
  %v405 = vtanh.pop %v402
  %v406 = vtanh.pop %v403
  %v407 = vmul.f32 %v404, 0.5
  %v408 = vmul.f32 %v405, 0.5
  %v409 = vmul.f32 %v406, 0.5
  %v410 = vadd.f32 %v407, 0.5
  %v411 = vadd.f32 %v408, 0.5
  %v412 = vadd.f32 %v409, 0.5
  %v413 = vtanh.pop %v400
  %v414 = vmul.f32 %v411, %v248
  %v415 = vmul.f32 %v410, %v413
  %v416 = vadd.f32 %v414, %v415
  %v417 = vtanh.pop %v416
  %v418 = vmul.f32 %v412, %v417
  %v419 = vld [vmem:[%s0 + $0x40] sm:$0xff]
  %v420 = vld [vmem:[%s0 + $0x48] sm:$0xff]
  %v421 = vld [vmem:[%s0 + $0x50] sm:$0xff]
  %v422 = vld [vmem:[%s0 + $0x58] sm:$0xff]
  %423 = vmatprep.subr.mxu0 %v20
  %424 = vmatpush1.msra.mxu0 %v19
  %425 = vmatprep.subr.mxu0 %v24
  %426 = vmatpush1.msra.mxu0 %v23
  %427 = vmatprep.subr.mxu0 %v28
  %428 = vmatpush1.msra.mxu0 %v27
  %429 = vmatprep.subr.mxu0 %v32
  %430 = vmatpush1.msra.mxu0 %v31
  %431 = vmatprep.subr.mxu0 %v36
  %432 = vmatpush1.msra.mxu0 %v35
  %433 = vmatprep.subr.mxu0 %v40
  %434 = vmatpush1.msra.mxu0 %v39
  %435 = vmatprep.subr.mxu0 %v44
  %436 = vmatpush1.msra.mxu0 %v43
  %437 = vmatprep.subr.mxu0 %v48
  %438 = vmatpush1.msra.mxu0 %v47
  %439 = vmatprep.subr.mxu0 %v52
  %440 = vmatpush1.msra.mxu0 %v51
  %441 = vmatprep.subr.mxu0 %v56
  %442 = vmatpush1.msra.mxu0 %v55
  %443 = vmatprep.subr.mxu0 %v60
  %444 = vmatpush1.msra.mxu0 %v59
  %445 = vmatprep.subr.mxu0 %v64
  %446 = vmatpush1.msra.mxu0 %v63
  %447 = vmatprep.subr.mxu0 %v68
  %448 = vmatpush1.msra.mxu0 %v67
  %449 = vmatprep.subr.mxu0 %v72
  %450 = vmatpush1.msra.mxu0 %v71
  %451 = vmatprep.subr.mxu0 %v76
  %452 = vmatpush1.msra.mxu0 %v75
  %453 = vmatprep.subr.mxu0 %v80
  %454 = vmatpush1.msra.mxu0 %v79
  %455 = vmatprep.subr.mxu0 0.0
  %456 = vmatpush1.msra.mxu0 0.0
  %457 = vmatprep.subr.mxu0 0.0
  %458 = vmatpush1.msra.mxu0 0.0
  %459 = vmatprep.subr.mxu0 0.0
  %460 = vmatpush1.msra.mxu0 0.0
  %461 = vmatprep.subr.mxu0 0.0
  %462 = vmatpush1.msra.mxu0 0.0
  %463 = vmatprep.subr.mxu0 0.0
  %464 = vmatpush1.msra.mxu0 0.0
  %465 = vmatprep.subr.mxu0 0.0
  %466 = vmatpush1.msra.mxu0 0.0
  %467 = vmatprep.subr.mxu0 0.0
  %468 = vmatpush1.msra.mxu0 0.0
  %469 = vmatprep.subr.mxu0 0.0
  %470 = vmatpush1.msra.mxu0 0.0
  %471 = vmatprep.subr.mxu0 0.0
  %472 = vmatpush1.msra.mxu0 0.0
  %473 = vmatprep.subr.mxu0 0.0
  %474 = vmatpush1.msra.mxu0 0.0
  %475 = vmatprep.subr.mxu0 0.0
  %476 = vmatpush1.msra.mxu0 0.0
  %477 = vmatprep.subr.mxu0 0.0
  %478 = vmatpush1.msra.mxu0 0.0
  %479 = vmatprep.subr.mxu0 0.0
  %480 = vmatpush1.msra.mxu0 0.0
  %481 = vmatprep.subr.mxu0 0.0
  %482 = vmatpush1.msra.mxu0 0.0
  %483 = vmatprep.subr.mxu0 0.0
  %484 = vmatpush1.msra.mxu0 0.0
  %485 = vmatprep.subr.mxu0 0.0
  %486 = vmatpush1.msra.mxu0 0.0
  %487 = vmatprep.mubr.f32.mxu0 0.0
  %488 = vmatmul.mubr.f32.gmra.mrb[0].mxu0 %v418
  %v489 = vpop.f32.mrb[0].mxu0
  %v490 = vadd.f32 0.0, %v489
  %v491 = vpop.f32.mrb[0].mxu0
  %v492 = vadd.f32 0.0, %v491
  %493 = vdwg.mxu0
  %494 = vmatprep.subr.mxu0 %v22
  %495 = vmatpush1.msra.mxu0 %v21
  %496 = vmatprep.subr.mxu0 %v26
  %497 = vmatpush1.msra.mxu0 %v25
  %498 = vmatprep.subr.mxu0 %v30
  %499 = vmatpush1.msra.mxu0 %v29
  %500 = vmatprep.subr.mxu0 %v34
  %501 = vmatpush1.msra.mxu0 %v33
  %502 = vmatprep.subr.mxu0 %v38
  %503 = vmatpush1.msra.mxu0 %v37
  %504 = vmatprep.subr.mxu0 %v42
  %505 = vmatpush1.msra.mxu0 %v41
  %506 = vmatprep.subr.mxu0 %v46
  %507 = vmatpush1.msra.mxu0 %v45
  %508 = vmatprep.subr.mxu0 %v50
  %509 = vmatpush1.msra.mxu0 %v49
  %510 = vmatprep.subr.mxu0 %v54
  %511 = vmatpush1.msra.mxu0 %v53
  %512 = vmatprep.subr.mxu0 %v58
  %513 = vmatpush1.msra.mxu0 %v57
  %514 = vmatprep.subr.mxu0 %v62
  %515 = vmatpush1.msra.mxu0 %v61
  %516 = vmatprep.subr.mxu0 %v66
  %517 = vmatpush1.msra.mxu0 %v65
  %518 = vmatprep.subr.mxu0 %v70
  %519 = vmatpush1.msra.mxu0 %v69
  %520 = vmatprep.subr.mxu0 %v74
  %521 = vmatpush1.msra.mxu0 %v73
  %522 = vmatprep.subr.mxu0 %v78
  %523 = vmatpush1.msra.mxu0 %v77
  %524 = vmatprep.subr.mxu0 %v82
  %525 = vmatpush1.msra.mxu0 %v81
  %526 = vmatprep.subr.mxu0 0.0
  %527 = vmatpush1.msra.mxu0 0.0
  %528 = vmatprep.subr.mxu0 0.0
  %529 = vmatpush1.msra.mxu0 0.0
  %530 = vmatprep.subr.mxu0 0.0
  %531 = vmatpush1.msra.mxu0 0.0
  %532 = vmatprep.subr.mxu0 0.0
  %533 = vmatpush1.msra.mxu0 0.0
  %534 = vmatprep.subr.mxu0 0.0
  %535 = vmatpush1.msra.mxu0 0.0
  %536 = vmatprep.subr.mxu0 0.0
  %537 = vmatpush1.msra.mxu0 0.0
  %538 = vmatprep.subr.mxu0 0.0
  %539 = vmatpush1.msra.mxu0 0.0
  %540 = vmatprep.subr.mxu0 0.0
  %541 = vmatpush1.msra.mxu0 0.0
  %542 = vmatprep.subr.mxu0 0.0
  %543 = vmatpush1.msra.mxu0 0.0
  %544 = vmatprep.subr.mxu0 0.0
  %545 = vmatpush1.msra.mxu0 0.0
  %546 = vmatprep.subr.mxu0 0.0
  %547 = vmatpush1.msra.mxu0 0.0
  %548 = vmatprep.subr.mxu0 0.0
  %549 = vmatpush1.msra.mxu0 0.0
  %550 = vmatprep.subr.mxu0 0.0
  %551 = vmatpush1.msra.mxu0 0.0
  %552 = vmatprep.subr.mxu0 0.0
  %553 = vmatpush1.msra.mxu0 0.0
  %554 = vmatprep.subr.mxu0 0.0
  %555 = vmatpush1.msra.mxu0 0.0
  %556 = vmatprep.subr.mxu0 0.0
  %557 = vmatpush1.msra.mxu0 0.0
  %558 = vmatprep.mubr.f32.mxu0 0.0
  %559 = vmatmul.mubr.f32.gmra.mrb[0].mxu0 %v418
  %v560 = vpop.f32.mrb[0].mxu0
  %v561 = vadd.f32 0.0, %v560
  %v562 = vpop.f32.mrb[0].mxu0
  %v563 = vadd.f32 0.0, %v562
  %564 = vdwg.mxu0
  %v565 = vadd.f32 %v419, %v490
  %v566 = vadd.f32 %v420, %v492
  %v567 = vadd.f32 %v421, %v561
  %v568 = vadd.f32 %v422, %v563
  %v569 = vmul.f32 %v565, 0.5
  %v570 = vmul.f32 %v566, 0.5
  %v571 = vmul.f32 %v567, 0.5
  %v572 = vtanh.pop %v569
  %v573 = vtanh.pop %v570
  %v574 = vtanh.pop %v571
  %v575 = vmul.f32 %v572, 0.5
  %v576 = vmul.f32 %v573, 0.5
  %v577 = vmul.f32 %v574, 0.5
  %v578 = vadd.f32 %v575, 0.5
  %v579 = vadd.f32 %v576, 0.5
  %v580 = vadd.f32 %v577, 0.5
  %v581 = vtanh.pop %v568
  %v582 = vmul.f32 %v579, %v416
  %v583 = vmul.f32 %v578, %v581
  %v584 = vadd.f32 %v582, %v583
  %v585 = vtanh.pop %v584
  %v586 = vmul.f32 %v580, %v585
  %v587 = vld [vmem:[%s0 + $0x60] sm:$0xff]
  %v588 = vld [vmem:[%s0 + $0x68] sm:$0xff]
  %v589 = vld [vmem:[%s0 + $0x70] sm:$0xff]
  %v590 = vld [vmem:[%s0 + $0x78] sm:$0xff]
  %591 = vmatprep.subr.mxu0 %v20
  %592 = vmatpush1.msra.mxu0 %v19
  %593 = vmatprep.subr.mxu0 %v24
  %594 = vmatpush1.msra.mxu0 %v23
  %595 = vmatprep.subr.mxu0 %v28
  %596 = vmatpush1.msra.mxu0 %v27
  %597 = vmatprep.subr.mxu0 %v32
  %598 = vmatpush1.msra.mxu0 %v31
  %599 = vmatprep.subr.mxu0 %v36
  %600 = vmatpush1.msra.mxu0 %v35
  %601 = vmatprep.subr.mxu0 %v40
  %602 = vmatpush1.msra.mxu0 %v39
  %603 = vmatprep.subr.mxu0 %v44
  %604 = vmatpush1.msra.mxu0 %v43
  %605 = vmatprep.subr.mxu0 %v48
  %606 = vmatpush1.msra.mxu0 %v47
  %607 = vmatprep.subr.mxu0 %v52
  %608 = vmatpush1.msra.mxu0 %v51
  %609 = vmatprep.subr.mxu0 %v56
  %610 = vmatpush1.msra.mxu0 %v55
  %611 = vmatprep.subr.mxu0 %v60
  %612 = vmatpush1.msra.mxu0 %v59
  %613 = vmatprep.subr.mxu0 %v64
  %614 = vmatpush1.msra.mxu0 %v63
  %615 = vmatprep.subr.mxu0 %v68
  %616 = vmatpush1.msra.mxu0 %v67
  %617 = vmatprep.subr.mxu0 %v72
  %618 = vmatpush1.msra.mxu0 %v71
  %619 = vmatprep.subr.mxu0 %v76
  %620 = vmatpush1.msra.mxu0 %v75
  %621 = vmatprep.subr.mxu0 %v80
  %622 = vmatpush1.msra.mxu0 %v79
  %623 = vmatprep.subr.mxu0 0.0
  %624 = vmatpush1.msra.mxu0 0.0
  %625 = vmatprep.subr.mxu0 0.0
  %626 = vmatpush1.msra.mxu0 0.0
  %627 = vmatprep.subr.mxu0 0.0
  %628 = vmatpush1.msra.mxu0 0.0
  %629 = vmatprep.subr.mxu0 0.0
  %630 = vmatpush1.msra.mxu0 0.0
  %631 = vmatprep.subr.mxu0 0.0
  %632 = vmatpush1.msra.mxu0 0.0
  %633 = vmatprep.subr.mxu0 0.0
  %634 = vmatpush1.msra.mxu0 0.0
  %635 = vmatprep.subr.mxu0 0.0
  %636 = vmatpush1.msra.mxu0 0.0
  %637 = vmatprep.subr.mxu0 0.0
  %638 = vmatpush1.msra.mxu0 0.0
  %639 = vmatprep.subr.mxu0 0.0
  %640 = vmatpush1.msra.mxu0 0.0
  %641 = vmatprep.subr.mxu0 0.0
  %642 = vmatpush1.msra.mxu0 0.0
  %643 = vmatprep.subr.mxu0 0.0
  %644 = vmatpush1.msra.mxu0 0.0
  %645 = vmatprep.subr.mxu0 0.0
  %646 = vmatpush1.msra.mxu0 0.0
  %647 = vmatprep.subr.mxu0 0.0
  %648 = vmatpush1.msra.mxu0 0.0
  %649 = vmatprep.subr.mxu0 0.0
  %650 = vmatpush1.msra.mxu0 0.0
  %651 = vmatprep.subr.mxu0 0.0
  %652 = vmatpush1.msra.mxu0 0.0
  %653 = vmatprep.subr.mxu0 0.0
  %654 = vmatpush1.msra.mxu0 0.0
  %655 = vmatprep.mubr.f32.mxu0 0.0
  %656 = vmatmul.mubr.f32.gmra.mrb[0].mxu0 %v586
  %v657 = vpop.f32.mrb[0].mxu0
  %v658 = vadd.f32 0.0, %v657
  %v659 = vpop.f32.mrb[0].mxu0
  %v660 = vadd.f32 0.0, %v659
  %661 = vdwg.mxu0
  %662 = vmatprep.subr.mxu0 %v22
  %663 = vmatpush1.msra.mxu0 %v21
  %664 = vmatprep.subr.mxu0 %v26
  %665 = vmatpush1.msra.mxu0 %v25
  %666 = vmatprep.subr.mxu0 %v30
  %667 = vmatpush1.msra.mxu0 %v29
  %668 = vmatprep.subr.mxu0 %v34
  %669 = vmatpush1.msra.mxu0 %v33
  %670 = vmatprep.subr.mxu0 %v38
  %671 = vmatpush1.msra.mxu0 %v37
  %672 = vmatprep.subr.mxu0 %v42
  %673 = vmatpush1.msra.mxu0 %v41
  %674 = vmatprep.subr.mxu0 %v46
  %675 = vmatpush1.msra.mxu0 %v45
  %676 = vmatprep.subr.mxu0 %v50
  %677 = vmatpush1.msra.mxu0 %v49
  %678 = vmatprep.subr.mxu0 %v54
  %679 = vmatpush1.msra.mxu0 %v53
  %680 = vmatprep.subr.mxu0 %v58
  %681 = vmatpush1.msra.mxu0 %v57
  %682 = vmatprep.subr.mxu0 %v62
  %683 = vmatpush1.msra.mxu0 %v61
  %684 = vmatprep.subr.mxu0 %v66
  %685 = vmatpush1.msra.mxu0 %v65
  %686 = vmatprep.subr.mxu0 %v70
  %687 = vmatpush1.msra.mxu0 %v69
  %688 = vmatprep.subr.mxu0 %v74
  %689 = vmatpush1.msra.mxu0 %v73
  %690 = vmatprep.subr.mxu0 %v78
  %691 = vmatpush1.msra.mxu0 %v77
  %692 = vmatprep.subr.mxu0 %v82
  %693 = vmatpush1.msra.mxu0 %v81
  %694 = vmatprep.subr.mxu0 0.0
  %695 = vmatpush1.msra.mxu0 0.0
  %696 = vmatprep.subr.mxu0 0.0
  %697 = vmatpush1.msra.mxu0 0.0
  %698 = vmatprep.subr.mxu0 0.0
  %699 = vmatpush1.msra.mxu0 0.0
  %700 = vmatprep.subr.mxu0 0.0
  %701 = vmatpush1.msra.mxu0 0.0
  %702 = vmatprep.subr.mxu0 0.0
  %703 = vmatpush1.msra.mxu0 0.0
  %704 = vmatprep.subr.mxu0 0.0
  %705 = vmatpush1.msra.mxu0 0.0
  %706 = vmatprep.subr.mxu0 0.0
  %707 = vmatpush1.msra.mxu0 0.0
  %708 = vmatprep.subr.mxu0 0.0
  %709 = vmatpush1.msra.mxu0 0.0
  %710 = vmatprep.subr.mxu0 0.0
  %711 = vmatpush1.msra.mxu0 0.0
  %712 = vmatprep.subr.mxu0 0.0
  %713 = vmatpush1.msra.mxu0 0.0
  %714 = vmatprep.subr.mxu0 0.0
  %715 = vmatpush1.msra.mxu0 0.0
  %716 = vmatprep.subr.mxu0 0.0
  %717 = vmatpush1.msra.mxu0 0.0
  %718 = vmatprep.subr.mxu0 0.0
  %719 = vmatpush1.msra.mxu0 0.0
  %720 = vmatprep.subr.mxu0 0.0
  %721 = vmatpush1.msra.mxu0 0.0
  %722 = vmatprep.subr.mxu0 0.0
  %723 = vmatpush1.msra.mxu0 0.0
  %724 = vmatprep.subr.mxu0 0.0
  %725 = vmatpush1.msra.mxu0 0.0
  %726 = vmatprep.mubr.f32.mxu0 0.0
  %727 = vmatmul.mubr.f32.gmra.mrb[0].mxu0 %v586
  %v728 = vpop.f32.mrb[0].mxu0
  %v729 = vadd.f32 0.0, %v728
  %v730 = vpop.f32.mrb[0].mxu0
  %v731 = vadd.f32 0.0, %v730
  %732 = vdwg.mxu0
  %v733 = vadd.f32 %v587, %v658
  %v734 = vadd.f32 %v588, %v660
  %v735 = vadd.f32 %v589, %v729
  %v736 = vadd.f32 %v590, %v731
  %v737 = vmul.f32 %v733, 0.5
  %v738 = vmul.f32 %v734, 0.5
  %v739 = vmul.f32 %v735, 0.5
  %v740 = vtanh.pop %v737
  %v741 = vtanh.pop %v738
  %v742 = vtanh.pop %v739
  %v743 = vmul.f32 %v740, 0.5
  %v744 = vmul.f32 %v741, 0.5
  %v745 = vmul.f32 %v742, 0.5
  %v746 = vadd.f32 %v743, 0.5
  %v747 = vadd.f32 %v744, 0.5
  %v748 = vadd.f32 %v745, 0.5
  %v749 = vtanh.pop %v736
  %v750 = vmul.f32 %v747, %v584
  %v751 = vmul.f32 %v746, %v749
  %v752 = vadd.f32 %v750, %v751
  %v753 = vtanh.pop %v752
  %v754 = vmul.f32 %v748, %v753
  %v755 = vld [vmem:[%s0 + $0x80] sm:$0xff]
  %v756 = vld [vmem:[%s0 + $0x88] sm:$0xff]
  %v757 = vld [vmem:[%s0 + $0x90] sm:$0xff]
  %v758 = vld [vmem:[%s0 + $0x98] sm:$0xff]
  %759 = vmatprep.subr.mxu0 %v20
  %760 = vmatpush1.msra.mxu0 %v19
  %761 = vmatprep.subr.mxu0 %v24
  %762 = vmatpush1.msra.mxu0 %v23
  %763 = vmatprep.subr.mxu0 %v28
  %764 = vmatpush1.msra.mxu0 %v27
  %765 = vmatprep.subr.mxu0 %v32
  %766 = vmatpush1.msra.mxu0 %v31
  %767 = vmatprep.subr.mxu0 %v36
  %768 = vmatpush1.msra.mxu0 %v35
  %769 = vmatprep.subr.mxu0 %v40
  %770 = vmatpush1.msra.mxu0 %v39
  %771 = vmatprep.subr.mxu0 %v44
  %772 = vmatpush1.msra.mxu0 %v43
  %773 = vmatprep.subr.mxu0 %v48
  %774 = vmatpush1.msra.mxu0 %v47
  %775 = vmatprep.subr.mxu0 %v52
  %776 = vmatpush1.msra.mxu0 %v51
  %777 = vmatprep.subr.mxu0 %v56
  %778 = vmatpush1.msra.mxu0 %v55
  %779 = vmatprep.subr.mxu0 %v60
  %780 = vmatpush1.msra.mxu0 %v59
  %781 = vmatprep.subr.mxu0 %v64
  %782 = vmatpush1.msra.mxu0 %v63
  %783 = vmatprep.subr.mxu0 %v68
  %784 = vmatpush1.msra.mxu0 %v67
  %785 = vmatprep.subr.mxu0 %v72
  %786 = vmatpush1.msra.mxu0 %v71
  %787 = vmatprep.subr.mxu0 %v76
  %788 = vmatpush1.msra.mxu0 %v75
  %789 = vmatprep.subr.mxu0 %v80
  %790 = vmatpush1.msra.mxu0 %v79
  %791 = vmatprep.subr.mxu0 0.0
  %792 = vmatpush1.msra.mxu0 0.0
  %793 = vmatprep.subr.mxu0 0.0
  %794 = vmatpush1.msra.mxu0 0.0
  %795 = vmatprep.subr.mxu0 0.0
  %796 = vmatpush1.msra.mxu0 0.0
  %797 = vmatprep.subr.mxu0 0.0
  %798 = vmatpush1.msra.mxu0 0.0
  %799 = vmatprep.subr.mxu0 0.0
  %800 = vmatpush1.msra.mxu0 0.0
  %801 = vmatprep.subr.mxu0 0.0
  %802 = vmatpush1.msra.mxu0 0.0
  %803 = vmatprep.subr.mxu0 0.0
  %804 = vmatpush1.msra.mxu0 0.0
  %805 = vmatprep.subr.mxu0 0.0
  %806 = vmatpush1.msra.mxu0 0.0
  %807 = vmatprep.subr.mxu0 0.0
  %808 = vmatpush1.msra.mxu0 0.0
  %809 = vmatprep.subr.mxu0 0.0
  %810 = vmatpush1.msra.mxu0 0.0
  %811 = vmatprep.subr.mxu0 0.0
  %812 = vmatpush1.msra.mxu0 0.0
  %813 = vmatprep.subr.mxu0 0.0
  %814 = vmatpush1.msra.mxu0 0.0
  %815 = vmatprep.subr.mxu0 0.0
  %816 = vmatpush1.msra.mxu0 0.0
  %817 = vmatprep.subr.mxu0 0.0
  %818 = vmatpush1.msra.mxu0 0.0
  %819 = vmatprep.subr.mxu0 0.0
  %820 = vmatpush1.msra.mxu0 0.0
  %821 = vmatprep.subr.mxu0 0.0
  %822 = vmatpush1.msra.mxu0 0.0
  %823 = vmatprep.mubr.f32.mxu0 0.0
  %824 = vmatmul.mubr.f32.gmra.mrb[0].mxu0 %v754
  %v825 = vpop.f32.mrb[0].mxu0
  %v826 = vadd.f32 0.0, %v825
  %v827 = vpop.f32.mrb[0].mxu0
  %v828 = vadd.f32 0.0, %v827
  %829 = vdwg.mxu0
  %830 = vmatprep.subr.mxu0 %v22
  %831 = vmatpush1.msra.mxu0 %v21
  %832 = vmatprep.subr.mxu0 %v26
  %833 = vmatpush1.msra.mxu0 %v25
  %834 = vmatprep.subr.mxu0 %v30
  %835 = vmatpush1.msra.mxu0 %v29
  %836 = vmatprep.subr.mxu0 %v34
  %837 = vmatpush1.msra.mxu0 %v33
  %838 = vmatprep.subr.mxu0 %v38
  %839 = vmatpush1.msra.mxu0 %v37
  %840 = vmatprep.subr.mxu0 %v42
  %841 = vmatpush1.msra.mxu0 %v41
  %842 = vmatprep.subr.mxu0 %v46
  %843 = vmatpush1.msra.mxu0 %v45
  %844 = vmatprep.subr.mxu0 %v50
  %845 = vmatpush1.msra.mxu0 %v49
  %846 = vmatprep.subr.mxu0 %v54
  %847 = vmatpush1.msra.mxu0 %v53
  %848 = vmatprep.subr.mxu0 %v58
  %849 = vmatpush1.msra.mxu0 %v57
  %850 = vmatprep.subr.mxu0 %v62
  %851 = vmatpush1.msra.mxu0 %v61
  %852 = vmatprep.subr.mxu0 %v66
  %853 = vmatpush1.msra.mxu0 %v65
  %854 = vmatprep.subr.mxu0 %v70
  %855 = vmatpush1.msra.mxu0 %v69
  %856 = vmatprep.subr.mxu0 %v74
  %857 = vmatpush1.msra.mxu0 %v73
  %858 = vmatprep.subr.mxu0 %v78
  %859 = vmatpush1.msra.mxu0 %v77
  %860 = vmatprep.subr.mxu0 %v82
  %861 = vmatpush1.msra.mxu0 %v81
  %862 = vmatprep.subr.mxu0 0.0
  %863 = vmatpush1.msra.mxu0 0.0
  %864 = vmatprep.subr.mxu0 0.0
  %865 = vmatpush1.msra.mxu0 0.0
  %866 = vmatprep.subr.mxu0 0.0
  %867 = vmatpush1.msra.mxu0 0.0
  %868 = vmatprep.subr.mxu0 0.0
  %869 = vmatpush1.msra.mxu0 0.0
  %870 = vmatprep.subr.mxu0 0.0
  %871 = vmatpush1.msra.mxu0 0.0
  %872 = vmatprep.subr.mxu0 0.0
  %873 = vmatpush1.msra.mxu0 0.0
  %874 = vmatprep.subr.mxu0 0.0
  %875 = vmatpush1.msra.mxu0 0.0
  %876 = vmatprep.subr.mxu0 0.0
  %877 = vmatpush1.msra.mxu0 0.0
  %878 = vmatprep.subr.mxu0 0.0
  %879 = vmatpush1.msra.mxu0 0.0
  %880 = vmatprep.subr.mxu0 0.0
  %881 = vmatpush1.msra.mxu0 0.0
  %882 = vmatprep.subr.mxu0 0.0
  %883 = vmatpush1.msra.mxu0 0.0
  %884 = vmatprep.subr.mxu0 0.0
  %885 = vmatpush1.msra.mxu0 0.0
  %886 = vmatprep.subr.mxu0 0.0
  %887 = vmatpush1.msra.mxu0 0.0
  %888 = vmatprep.subr.mxu0 0.0
  %889 = vmatpush1.msra.mxu0 0.0
  %890 = vmatprep.subr.mxu0 0.0
  %891 = vmatpush1.msra.mxu0 0.0
  %892 = vmatprep.subr.mxu0 0.0
  %893 = vmatpush1.msra.mxu0 0.0
  %894 = vmatprep.mubr.f32.mxu0 0.0
  %895 = vmatmul.mubr.f32.gmra.mrb[0].mxu0 %v754
  %v896 = vpop.f32.mrb[0].mxu0
  %v897 = vadd.f32 0.0, %v896
  %v898 = vpop.f32.mrb[0].mxu0
  %v899 = vadd.f32 0.0, %v898
  %900 = vdwg.mxu0
  %v901 = vadd.f32 %v755, %v826
  %v902 = vadd.f32 %v756, %v828
  %v903 = vadd.f32 %v757, %v897
  %v904 = vadd.f32 %v758, %v899
  %v905 = vmul.f32 %v901, 0.5
  %v906 = vmul.f32 %v902, 0.5
  %v907 = vmul.f32 %v903, 0.5
  %v908 = vtanh.pop %v905
  %v909 = vtanh.pop %v906
  %v910 = vtanh.pop %v907
  %v911 = vmul.f32 %v908, 0.5
  %v912 = vmul.f32 %v909, 0.5
  %v913 = vmul.f32 %v910, 0.5
  %v914 = vadd.f32 %v911, 0.5
  %v915 = vadd.f32 %v912, 0.5
  %v916 = vadd.f32 %v913, 0.5
  %v917 = vtanh.pop %v904
  %v918 = vmul.f32 %v915, %v752
  %v919 = vmul.f32 %v914, %v917
  %v920 = vadd.f32 %v918, %v919
  %v921 = vtanh.pop %v920
  %v922 = vmul.f32 %v916, %v921
  %v923 = vld [vmem:[%s0 + $0xa0] sm:$0xff]
  %v924 = vld [vmem:[%s0 + $0xa8] sm:$0xff]
  %v925 = vld [vmem:[%s0 + $0xb0] sm:$0xff]
  %v926 = vld [vmem:[%s0 + $0xb8] sm:$0xff]
  %927 = vmatprep.subr.mxu0 %v20
  %928 = vmatpush1.msra.mxu0 %v19
  %929 = vmatprep.subr.mxu0 %v24
  %930 = vmatpush1.msra.mxu0 %v23
  %931 = vmatprep.subr.mxu0 %v28
  %932 = vmatpush1.msra.mxu0 %v27
  %933 = vmatprep.subr.mxu0 %v32
  %934 = vmatpush1.msra.mxu0 %v31
  %935 = vmatprep.subr.mxu0 %v36
  %936 = vmatpush1.msra.mxu0 %v35
  %937 = vmatprep.subr.mxu0 %v40
  %938 = vmatpush1.msra.mxu0 %v39
  %939 = vmatprep.subr.mxu0 %v44
  %940 = vmatpush1.msra.mxu0 %v43
  %941 = vmatprep.subr.mxu0 %v48
  %942 = vmatpush1.msra.mxu0 %v47
  %943 = vmatprep.subr.mxu0 %v52
  %944 = vmatpush1.msra.mxu0 %v51
  %945 = vmatprep.subr.mxu0 %v56
  %946 = vmatpush1.msra.mxu0 %v55
  %947 = vmatprep.subr.mxu0 %v60
  %948 = vmatpush1.msra.mxu0 %v59
  %949 = vmatprep.subr.mxu0 %v64
  %950 = vmatpush1.msra.mxu0 %v63
  %951 = vmatprep.subr.mxu0 %v68
  %952 = vmatpush1.msra.mxu0 %v67
  %953 = vmatprep.subr.mxu0 %v72
  %954 = vmatpush1.msra.mxu0 %v71
  %955 = vmatprep.subr.mxu0 %v76
  %956 = vmatpush1.msra.mxu0 %v75
  %957 = vmatprep.subr.mxu0 %v80
  %958 = vmatpush1.msra.mxu0 %v79
  %959 = vmatprep.subr.mxu0 0.0
  %960 = vmatpush1.msra.mxu0 0.0
  %961 = vmatprep.subr.mxu0 0.0
  %962 = vmatpush1.msra.mxu0 0.0
  %963 = vmatprep.subr.mxu0 0.0
  %964 = vmatpush1.msra.mxu0 0.0
  %965 = vmatprep.subr.mxu0 0.0
  %966 = vmatpush1.msra.mxu0 0.0
  %967 = vmatprep.subr.mxu0 0.0
  %968 = vmatpush1.msra.mxu0 0.0
  %969 = vmatprep.subr.mxu0 0.0
  %970 = vmatpush1.msra.mxu0 0.0
  %971 = vmatprep.subr.mxu0 0.0
  %972 = vmatpush1.msra.mxu0 0.0
  %973 = vmatprep.subr.mxu0 0.0
  %974 = vmatpush1.msra.mxu0 0.0
  %975 = vmatprep.subr.mxu0 0.0
  %976 = vmatpush1.msra.mxu0 0.0
  %977 = vmatprep.subr.mxu0 0.0
  %978 = vmatpush1.msra.mxu0 0.0
  %979 = vmatprep.subr.mxu0 0.0
  %980 = vmatpush1.msra.mxu0 0.0
  %981 = vmatprep.subr.mxu0 0.0
  %982 = vmatpush1.msra.mxu0 0.0
  %983 = vmatprep.subr.mxu0 0.0
  %984 = vmatpush1.msra.mxu0 0.0
  %985 = vmatprep.subr.mxu0 0.0
  %986 = vmatpush1.msra.mxu0 0.0
  %987 = vmatprep.subr.mxu0 0.0
  %988 = vmatpush1.msra.mxu0 0.0
  %989 = vmatprep.subr.mxu0 0.0
  %990 = vmatpush1.msra.mxu0 0.0
  %991 = vmatprep.mubr.f32.mxu0 0.0
  %992 = vmatmul.mubr.f32.gmra.mrb[0].mxu0 %v922
  %v993 = vpop.f32.mrb[0].mxu0
  %v994 = vadd.f32 0.0, %v993
  %v995 = vpop.f32.mrb[0].mxu0
  %v996 = vadd.f32 0.0, %v995
  %997 = vdwg.mxu0
  %998 = vmatprep.subr.mxu0 %v22
  %999 = vmatpush1.msra.mxu0 %v21
  %1000 = vmatprep.subr.mxu0 %v26
  %1001 = vmatpush1.msra.mxu0 %v25
  %1002 = vmatprep.subr.mxu0 %v30
  %1003 = vmatpush1.msra.mxu0 %v29
  %1004 = vmatprep.subr.mxu0 %v34
  %1005 = vmatpush1.msra.mxu0 %v33
  %1006 = vmatprep.subr.mxu0 %v38
  %1007 = vmatpush1.msra.mxu0 %v37
  %1008 = vmatprep.subr.mxu0 %v42
  %1009 = vmatpush1.msra.mxu0 %v41
  %1010 = vmatprep.subr.mxu0 %v46
  %1011 = vmatpush1.msra.mxu0 %v45
  %1012 = vmatprep.subr.mxu0 %v50
  %1013 = vmatpush1.msra.mxu0 %v49
  %1014 = vmatprep.subr.mxu0 %v54
  %1015 = vmatpush1.msra.mxu0 %v53
  %1016 = vmatprep.subr.mxu0 %v58
  %1017 = vmatpush1.msra.mxu0 %v57
  %1018 = vmatprep.subr.mxu0 %v62
  %1019 = vmatpush1.msra.mxu0 %v61
  %1020 = vmatprep.subr.mxu0 %v66
  %1021 = vmatpush1.msra.mxu0 %v65
  %1022 = vmatprep.subr.mxu0 %v70
  %1023 = vmatpush1.msra.mxu0 %v69
  %1024 = vmatprep.subr.mxu0 %v74
  %1025 = vmatpush1.msra.mxu0 %v73
  %1026 = vmatprep.subr.mxu0 %v78
  %1027 = vmatpush1.msra.mxu0 %v77
  %1028 = vmatprep.subr.mxu0 %v82
  %1029 = vmatpush1.msra.mxu0 %v81
  %1030 = vmatprep.subr.mxu0 0.0
  %1031 = vmatpush1.msra.mxu0 0.0
  %1032 = vmatprep.subr.mxu0 0.0
  %1033 = vmatpush1.msra.mxu0 0.0
  %1034 = vmatprep.subr.mxu0 0.0
  %1035 = vmatpush1.msra.mxu0 0.0
  %1036 = vmatprep.subr.mxu0 0.0
  %1037 = vmatpush1.msra.mxu0 0.0
  %1038 = vmatprep.subr.mxu0 0.0
  %1039 = vmatpush1.msra.mxu0 0.0
  %1040 = vmatprep.subr.mxu0 0.0
  %1041 = vmatpush1.msra.mxu0 0.0
  %1042 = vmatprep.subr.mxu0 0.0
  %1043 = vmatpush1.msra.mxu0 0.0
  %1044 = vmatprep.subr.mxu0 0.0
  %1045 = vmatpush1.msra.mxu0 0.0
  %1046 = vmatprep.subr.mxu0 0.0
  %1047 = vmatpush1.msra.mxu0 0.0
  %1048 = vmatprep.subr.mxu0 0.0
  %1049 = vmatpush1.msra.mxu0 0.0
  %1050 = vmatprep.subr.mxu0 0.0
  %1051 = vmatpush1.msra.mxu0 0.0
  %1052 = vmatprep.subr.mxu0 0.0
  %1053 = vmatpush1.msra.mxu0 0.0
  %1054 = vmatprep.subr.mxu0 0.0
  %1055 = vmatpush1.msra.mxu0 0.0
  %1056 = vmatprep.subr.mxu0 0.0
  %1057 = vmatpush1.msra.mxu0 0.0
  %1058 = vmatprep.subr.mxu0 0.0
  %1059 = vmatpush1.msra.mxu0 0.0
  %1060 = vmatprep.subr.mxu0 0.0
  %1061 = vmatpush1.msra.mxu0 0.0
  %1062 = vmatprep.mubr.f32.mxu0 0.0
  %1063 = vmatmul.mubr.f32.gmra.mrb[0].mxu0 %v922
  %v1064 = vpop.f32.mrb[0].mxu0
  %v1065 = vadd.f32 0.0, %v1064
  %v1066 = vpop.f32.mrb[0].mxu0
  %v1067 = vadd.f32 0.0, %v1066
  %1068 = vdwg.mxu0
  %v1069 = vadd.f32 %v923, %v994
  %v1070 = vadd.f32 %v924, %v996
  %v1071 = vadd.f32 %v925, %v1065
  %v1072 = vadd.f32 %v926, %v1067
  %v1073 = vmul.f32 %v1069, 0.5
  %v1074 = vmul.f32 %v1070, 0.5
  %v1075 = vmul.f32 %v1071, 0.5
  %v1076 = vtanh.pop %v1073
  %v1077 = vtanh.pop %v1074
  %v1078 = vtanh.pop %v1075
  %v1079 = vmul.f32 %v1076, 0.5
  %v1080 = vmul.f32 %v1077, 0.5
  %v1081 = vmul.f32 %v1078, 0.5
  %v1082 = vadd.f32 %v1079, 0.5
  %v1083 = vadd.f32 %v1080, 0.5
  %v1084 = vadd.f32 %v1081, 0.5
  %v1085 = vtanh.pop %v1072
  %v1086 = vmul.f32 %v1083, %v920
  %v1087 = vmul.f32 %v1082, %v1085
  %v1088 = vadd.f32 %v1086, %v1087
  %v1089 = vtanh.pop %v1088
  %v1090 = vmul.f32 %v1084, %v1089
  %v1091 = vld [vmem:[%s0 + $0xc0] sm:$0xff]
  %v1092 = vld [vmem:[%s0 + $0xc8] sm:$0xff]
  %v1093 = vld [vmem:[%s0 + $0xd0] sm:$0xff]
  %v1094 = vld [vmem:[%s0 + $0xd8] sm:$0xff]
  %1095 = vmatprep.subr.mxu0 %v20
  %1096 = vmatpush1.msra.mxu0 %v19
  %1097 = vmatprep.subr.mxu0 %v24
  %1098 = vmatpush1.msra.mxu0 %v23
  %1099 = vmatprep.subr.mxu0 %v28
  %1100 = vmatpush1.msra.mxu0 %v27
  %1101 = vmatprep.subr.mxu0 %v32
  %1102 = vmatpush1.msra.mxu0 %v31
  %1103 = vmatprep.subr.mxu0 %v36
  %1104 = vmatpush1.msra.mxu0 %v35
  %1105 = vmatprep.subr.mxu0 %v40
  %1106 = vmatpush1.msra.mxu0 %v39
  %1107 = vmatprep.subr.mxu0 %v44
  %1108 = vmatpush1.msra.mxu0 %v43
  %1109 = vmatprep.subr.mxu0 %v48
  %1110 = vmatpush1.msra.mxu0 %v47
  %1111 = vmatprep.subr.mxu0 %v52
  %1112 = vmatpush1.msra.mxu0 %v51
  %1113 = vmatprep.subr.mxu0 %v56
  %1114 = vmatpush1.msra.mxu0 %v55
  %1115 = vmatprep.subr.mxu0 %v60
  %1116 = vmatpush1.msra.mxu0 %v59
  %1117 = vmatprep.subr.mxu0 %v64
  %1118 = vmatpush1.msra.mxu0 %v63
  %1119 = vmatprep.subr.mxu0 %v68
  %1120 = vmatpush1.msra.mxu0 %v67
  %1121 = vmatprep.subr.mxu0 %v72
  %1122 = vmatpush1.msra.mxu0 %v71
  %1123 = vmatprep.subr.mxu0 %v76
  %1124 = vmatpush1.msra.mxu0 %v75
  %1125 = vmatprep.subr.mxu0 %v80
  %1126 = vmatpush1.msra.mxu0 %v79
  %1127 = vmatprep.subr.mxu0 0.0
  %1128 = vmatpush1.msra.mxu0 0.0
  %1129 = vmatprep.subr.mxu0 0.0
  %1130 = vmatpush1.msra.mxu0 0.0
  %1131 = vmatprep.subr.mxu0 0.0
  %1132 = vmatpush1.msra.mxu0 0.0
  %1133 = vmatprep.subr.mxu0 0.0
  %1134 = vmatpush1.msra.mxu0 0.0
  %1135 = vmatprep.subr.mxu0 0.0
  %1136 = vmatpush1.msra.mxu0 0.0
  %1137 = vmatprep.subr.mxu0 0.0
  %1138 = vmatpush1.msra.mxu0 0.0
  %1139 = vmatprep.subr.mxu0 0.0
  %1140 = vmatpush1.msra.mxu0 0.0
  %1141 = vmatprep.subr.mxu0 0.0
  %1142 = vmatpush1.msra.mxu0 0.0
  %1143 = vmatprep.subr.mxu0 0.0
  %1144 = vmatpush1.msra.mxu0 0.0
  %1145 = vmatprep.subr.mxu0 0.0
  %1146 = vmatpush1.msra.mxu0 0.0
  %1147 = vmatprep.subr.mxu0 0.0
  %1148 = vmatpush1.msra.mxu0 0.0
  %1149 = vmatprep.subr.mxu0 0.0
  %1150 = vmatpush1.msra.mxu0 0.0
  %1151 = vmatprep.subr.mxu0 0.0
  %1152 = vmatpush1.msra.mxu0 0.0
  %1153 = vmatprep.subr.mxu0 0.0
  %1154 = vmatpush1.msra.mxu0 0.0
  %1155 = vmatprep.subr.mxu0 0.0
  %1156 = vmatpush1.msra.mxu0 0.0
  %1157 = vmatprep.subr.mxu0 0.0
  %1158 = vmatpush1.msra.mxu0 0.0
  %1159 = vmatprep.mubr.f32.mxu0 0.0
  %1160 = vmatmul.mubr.f32.gmra.mrb[0].mxu0 %v1090
  %v1161 = vpop.f32.mrb[0].mxu0
  %v1162 = vadd.f32 0.0, %v1161
  %v1163 = vpop.f32.mrb[0].mxu0
  %v1164 = vadd.f32 0.0, %v1163
  %1165 = vdwg.mxu0
  %1166 = vmatprep.subr.mxu0 %v22
  %1167 = vmatpush1.msra.mxu0 %v21
  %1168 = vmatprep.subr.mxu0 %v26
  %1169 = vmatpush1.msra.mxu0 %v25
  %1170 = vmatprep.subr.mxu0 %v30
  %1171 = vmatpush1.msra.mxu0 %v29
  %1172 = vmatprep.subr.mxu0 %v34
  %1173 = vmatpush1.msra.mxu0 %v33
  %1174 = vmatprep.subr.mxu0 %v38
  %1175 = vmatpush1.msra.mxu0 %v37
  %1176 = vmatprep.subr.mxu0 %v42
  %1177 = vmatpush1.msra.mxu0 %v41
  %1178 = vmatprep.subr.mxu0 %v46
  %1179 = vmatpush1.msra.mxu0 %v45
  %1180 = vmatprep.subr.mxu0 %v50
  %1181 = vmatpush1.msra.mxu0 %v49
  %1182 = vmatprep.subr.mxu0 %v54
  %1183 = vmatpush1.msra.mxu0 %v53
  %1184 = vmatprep.subr.mxu0 %v58
  %1185 = vmatpush1.msra.mxu0 %v57
  %1186 = vmatprep.subr.mxu0 %v62
  %1187 = vmatpush1.msra.mxu0 %v61
  %1188 = vmatprep.subr.mxu0 %v66
  %1189 = vmatpush1.msra.mxu0 %v65
  %1190 = vmatprep.subr.mxu0 %v70
  %1191 = vmatpush1.msra.mxu0 %v69
  %1192 = vmatprep.subr.mxu0 %v74
  %1193 = vmatpush1.msra.mxu0 %v73
  %1194 = vmatprep.subr.mxu0 %v78
  %1195 = vmatpush1.msra.mxu0 %v77
  %1196 = vmatprep.subr.mxu0 %v82
  %1197 = vmatpush1.msra.mxu0 %v81
  %1198 = vmatprep.subr.mxu0 0.0
  %1199 = vmatpush1.msra.mxu0 0.0
  %1200 = vmatprep.subr.mxu0 0.0
  %1201 = vmatpush1.msra.mxu0 0.0
  %1202 = vmatprep.subr.mxu0 0.0
  %1203 = vmatpush1.msra.mxu0 0.0
  %1204 = vmatprep.subr.mxu0 0.0
  %1205 = vmatpush1.msra.mxu0 0.0
  %1206 = vmatprep.subr.mxu0 0.0
  %1207 = vmatpush1.msra.mxu0 0.0
  %1208 = vmatprep.subr.mxu0 0.0
  %1209 = vmatpush1.msra.mxu0 0.0
  %1210 = vmatprep.subr.mxu0 0.0
  %1211 = vmatpush1.msra.mxu0 0.0
  %1212 = vmatprep.subr.mxu0 0.0
  %1213 = vmatpush1.msra.mxu0 0.0
  %1214 = vmatprep.subr.mxu0 0.0
  %1215 = vmatpush1.msra.mxu0 0.0
  %1216 = vmatprep.subr.mxu0 0.0
  %1217 = vmatpush1.msra.mxu0 0.0
  %1218 = vmatprep.subr.mxu0 0.0
  %1219 = vmatpush1.msra.mxu0 0.0
  %1220 = vmatprep.subr.mxu0 0.0
  %1221 = vmatpush1.msra.mxu0 0.0
  %1222 = vmatprep.subr.mxu0 0.0
  %1223 = vmatpush1.msra.mxu0 0.0
  %1224 = vmatprep.subr.mxu0 0.0
  %1225 = vmatpush1.msra.mxu0 0.0
  %1226 = vmatprep.subr.mxu0 0.0
  %1227 = vmatpush1.msra.mxu0 0.0
  %1228 = vmatprep.subr.mxu0 0.0
  %1229 = vmatpush1.msra.mxu0 0.0
  %1230 = vmatprep.mubr.f32.mxu0 0.0
  %1231 = vmatmul.mubr.f32.gmra.mrb[0].mxu0 %v1090
  %v1232 = vpop.f32.mrb[0].mxu0
  %v1233 = vadd.f32 0.0, %v1232
  %v1234 = vpop.f32.mrb[0].mxu0
  %v1235 = vadd.f32 0.0, %v1234
  %1236 = vdwg.mxu0
  %v1237 = vadd.f32 %v1091, %v1162
  %v1238 = vadd.f32 %v1092, %v1164
  %v1239 = vadd.f32 %v1093, %v1233
  %v1240 = vadd.f32 %v1094, %v1235
  %v1241 = vmul.f32 %v1237, 0.5
  %v1242 = vmul.f32 %v1238, 0.5
  %v1243 = vmul.f32 %v1239, 0.5
  %v1244 = vtanh.pop %v1241
  %v1245 = vtanh.pop %v1242
  %v1246 = vtanh.pop %v1243
  %v1247 = vmul.f32 %v1244, 0.5
  %v1248 = vmul.f32 %v1245, 0.5
  %v1249 = vmul.f32 %v1246, 0.5
  %v1250 = vadd.f32 %v1247, 0.5
  %v1251 = vadd.f32 %v1248, 0.5
  %v1252 = vadd.f32 %v1249, 0.5
  %v1253 = vtanh.pop %v1240
  %v1254 = vmul.f32 %v1251, %v1088
  %v1255 = vmul.f32 %v1250, %v1253
  %v1256 = vadd.f32 %v1254, %v1255
  %v1257 = vtanh.pop %v1256
  %v1258 = vmul.f32 %v1252, %v1257
  %v1259 = vld [vmem:[%s0 + $0xe0] sm:$0xff]
  %v1260 = vld [vmem:[%s0 + $0xe8] sm:$0xff]
  %v1261 = vld [vmem:[%s0 + $0xf0] sm:$0xff]
  %v1262 = vld [vmem:[%s0 + $0xf8] sm:$0xff]
  %1263 = vmatprep.subr.mxu0 %v20
  %1264 = vmatpush1.msra.mxu0 %v19
  %1265 = vmatprep.subr.mxu0 %v24
  %1266 = vmatpush1.msra.mxu0 %v23
  %1267 = vmatprep.subr.mxu0 %v28
  %1268 = vmatpush1.msra.mxu0 %v27
  %1269 = vmatprep.subr.mxu0 %v32
  %1270 = vmatpush1.msra.mxu0 %v31
  %1271 = vmatprep.subr.mxu0 %v36
  %1272 = vmatpush1.msra.mxu0 %v35
  %1273 = vmatprep.subr.mxu0 %v40
  %1274 = vmatpush1.msra.mxu0 %v39
  %1275 = vmatprep.subr.mxu0 %v44
  %1276 = vmatpush1.msra.mxu0 %v43
  %1277 = vmatprep.subr.mxu0 %v48
  %1278 = vmatpush1.msra.mxu0 %v47
  %1279 = vmatprep.subr.mxu0 %v52
  %1280 = vmatpush1.msra.mxu0 %v51
  %1281 = vmatprep.subr.mxu0 %v56
  %1282 = vmatpush1.msra.mxu0 %v55
  %1283 = vmatprep.subr.mxu0 %v60
  %1284 = vmatpush1.msra.mxu0 %v59
  %1285 = vmatprep.subr.mxu0 %v64
  %1286 = vmatpush1.msra.mxu0 %v63
  %1287 = vmatprep.subr.mxu0 %v68
  %1288 = vmatpush1.msra.mxu0 %v67
  %1289 = vmatprep.subr.mxu0 %v72
  %1290 = vmatpush1.msra.mxu0 %v71
  %1291 = vmatprep.subr.mxu0 %v76
  %1292 = vmatpush1.msra.mxu0 %v75
  %1293 = vmatprep.subr.mxu0 %v80
  %1294 = vmatpush1.msra.mxu0 %v79
  %1295 = vmatprep.subr.mxu0 0.0
  %1296 = vmatpush1.msra.mxu0 0.0
  %1297 = vmatprep.subr.mxu0 0.0
  %1298 = vmatpush1.msra.mxu0 0.0
  %1299 = vmatprep.subr.mxu0 0.0
  %1300 = vmatpush1.msra.mxu0 0.0
  %1301 = vmatprep.subr.mxu0 0.0
  %1302 = vmatpush1.msra.mxu0 0.0
  %1303 = vmatprep.subr.mxu0 0.0
  %1304 = vmatpush1.msra.mxu0 0.0
  %1305 = vmatprep.subr.mxu0 0.0
  %1306 = vmatpush1.msra.mxu0 0.0
  %1307 = vmatprep.subr.mxu0 0.0
  %1308 = vmatpush1.msra.mxu0 0.0
  %1309 = vmatprep.subr.mxu0 0.0
  %1310 = vmatpush1.msra.mxu0 0.0
  %1311 = vmatprep.subr.mxu0 0.0
  %1312 = vmatpush1.msra.mxu0 0.0
  %1313 = vmatprep.subr.mxu0 0.0
  %1314 = vmatpush1.msra.mxu0 0.0
  %1315 = vmatprep.subr.mxu0 0.0
  %1316 = vmatpush1.msra.mxu0 0.0
  %1317 = vmatprep.subr.mxu0 0.0
  %1318 = vmatpush1.msra.mxu0 0.0
  %1319 = vmatprep.subr.mxu0 0.0
  %1320 = vmatpush1.msra.mxu0 0.0
  %1321 = vmatprep.subr.mxu0 0.0
  %1322 = vmatpush1.msra.mxu0 0.0
  %1323 = vmatprep.subr.mxu0 0.0
  %1324 = vmatpush1.msra.mxu0 0.0
  %1325 = vmatprep.subr.mxu0 0.0
  %1326 = vmatpush1.msra.mxu0 0.0
  %1327 = vmatprep.mubr.f32.mxu0 0.0
  %1328 = vmatmul.mubr.f32.gmra.mrb[0].mxu0 %v1258
  %v1329 = vpop.f32.mrb[0].mxu0
  %v1330 = vadd.f32 0.0, %v1329
  %v1331 = vpop.f32.mrb[0].mxu0
  %v1332 = vadd.f32 0.0, %v1331
  %1333 = vdwg.mxu0
  %1334 = vmatprep.subr.mxu0 %v22
  %1335 = vmatpush1.msra.mxu0 %v21
  %1336 = vmatprep.subr.mxu0 %v26
  %1337 = vmatpush1.msra.mxu0 %v25
  %1338 = vmatprep.subr.mxu0 %v30
  %1339 = vmatpush1.msra.mxu0 %v29
  %1340 = vmatprep.subr.mxu0 %v34
  %1341 = vmatpush1.msra.mxu0 %v33
  %1342 = vmatprep.subr.mxu0 %v38
  %1343 = vmatpush1.msra.mxu0 %v37
  %1344 = vmatprep.subr.mxu0 %v42
  %1345 = vmatpush1.msra.mxu0 %v41
  %1346 = vmatprep.subr.mxu0 %v46
  %1347 = vmatpush1.msra.mxu0 %v45
  %1348 = vmatprep.subr.mxu0 %v50
  %1349 = vmatpush1.msra.mxu0 %v49
  %1350 = vmatprep.subr.mxu0 %v54
  %1351 = vmatpush1.msra.mxu0 %v53
  %1352 = vmatprep.subr.mxu0 %v58
  %1353 = vmatpush1.msra.mxu0 %v57
  %1354 = vmatprep.subr.mxu0 %v62
  %1355 = vmatpush1.msra.mxu0 %v61
  %1356 = vmatprep.subr.mxu0 %v66
  %1357 = vmatpush1.msra.mxu0 %v65
  %1358 = vmatprep.subr.mxu0 %v70
  %1359 = vmatpush1.msra.mxu0 %v69
  %1360 = vmatprep.subr.mxu0 %v74
  %1361 = vmatpush1.msra.mxu0 %v73
  %1362 = vmatprep.subr.mxu0 %v78
  %1363 = vmatpush1.msra.mxu0 %v77
  %1364 = vmatprep.subr.mxu0 %v82
  %1365 = vmatpush1.msra.mxu0 %v81
  %1366 = vmatprep.subr.mxu0 0.0
  %1367 = vmatpush1.msra.mxu0 0.0
  %1368 = vmatprep.subr.mxu0 0.0
  %1369 = vmatpush1.msra.mxu0 0.0
  %1370 = vmatprep.subr.mxu0 0.0
  %1371 = vmatpush1.msra.mxu0 0.0
  %1372 = vmatprep.subr.mxu0 0.0
  %1373 = vmatpush1.msra.mxu0 0.0
  %1374 = vmatprep.subr.mxu0 0.0
  %1375 = vmatpush1.msra.mxu0 0.0
  %1376 = vmatprep.subr.mxu0 0.0
  %1377 = vmatpush1.msra.mxu0 0.0
  %1378 = vmatprep.subr.mxu0 0.0
  %1379 = vmatpush1.msra.mxu0 0.0
  %1380 = vmatprep.subr.mxu0 0.0
  %1381 = vmatpush1.msra.mxu0 0.0
  %1382 = vmatprep.subr.mxu0 0.0
  %1383 = vmatpush1.msra.mxu0 0.0
  %1384 = vmatprep.subr.mxu0 0.0
  %1385 = vmatpush1.msra.mxu0 0.0
  %1386 = vmatprep.subr.mxu0 0.0
  %1387 = vmatpush1.msra.mxu0 0.0
  %1388 = vmatprep.subr.mxu0 0.0
  %1389 = vmatpush1.msra.mxu0 0.0
  %1390 = vmatprep.subr.mxu0 0.0
  %1391 = vmatpush1.msra.mxu0 0.0
  %1392 = vmatprep.subr.mxu0 0.0
  %1393 = vmatpush1.msra.mxu0 0.0
  %1394 = vmatprep.subr.mxu0 0.0
  %1395 = vmatpush1.msra.mxu0 0.0
  %1396 = vmatprep.subr.mxu0 0.0
  %1397 = vmatpush1.msra.mxu0 0.0
  %1398 = vmatprep.mubr.f32.mxu0 0.0
  %1399 = vmatmul.mubr.f32.gmra.mrb[0].mxu0 %v1258
  %v1400 = vpop.f32.mrb[0].mxu0
  %v1401 = vadd.f32 0.0, %v1400
  %v1402 = vpop.f32.mrb[0].mxu0
  %v1403 = vadd.f32 0.0, %v1402
  %1404 = vdwg.mxu0
  %v1405 = vadd.f32 %v1259, %v1330
  %v1406 = vadd.f32 %v1260, %v1332
  %v1407 = vadd.f32 %v1261, %v1401
  %v1408 = vadd.f32 %v1262, %v1403
  %v1409 = vmul.f32 %v1405, 0.5
  %v1410 = vmul.f32 %v1406, 0.5
  %v1411 = vmul.f32 %v1407, 0.5
  %v1412 = vtanh.pop %v1409
  %v1413 = vtanh.pop %v1410
  %v1414 = vtanh.pop %v1411
  %v1415 = vmul.f32 %v1412, 0.5
  %v1416 = vmul.f32 %v1413, 0.5
  %v1417 = vmul.f32 %v1414, 0.5
  %v1418 = vadd.f32 %v1415, 0.5
  %v1419 = vadd.f32 %v1416, 0.5
  %v1420 = vadd.f32 %v1417, 0.5
  %v1421 = vtanh.pop %v1408
  %v1422 = vmul.f32 %v1419, %v1256
  %v1423 = vmul.f32 %v1418, %v1421
  %v1424 = vadd.f32 %v1422, %v1423
  %v1425 = vtanh.pop %v1424
  %v1426 = vmul.f32 %v1420, %v1425
  %v1427 = vld [vmem:[%s0 + $0x100] sm:$0xff]
  %v1428 = vld [vmem:[%s0 + $0x108] sm:$0xff]
  %v1429 = vld [vmem:[%s0 + $0x110] sm:$0xff]
  %v1430 = vld [vmem:[%s0 + $0x118] sm:$0xff]
  %1431 = vmatprep.subr.mxu0 %v20
  %1432 = vmatpush1.msra.mxu0 %v19
  %1433 = vmatprep.subr.mxu0 %v24
  %1434 = vmatpush1.msra.mxu0 %v23
  %1435 = vmatprep.subr.mxu0 %v28
  %1436 = vmatpush1.msra.mxu0 %v27
  %1437 = vmatprep.subr.mxu0 %v32
  %1438 = vmatpush1.msra.mxu0 %v31
  %1439 = vmatprep.subr.mxu0 %v36
  %1440 = vmatpush1.msra.mxu0 %v35
  %1441 = vmatprep.subr.mxu0 %v40
  %1442 = vmatpush1.msra.mxu0 %v39
  %1443 = vmatprep.subr.mxu0 %v44
  %1444 = vmatpush1.msra.mxu0 %v43
  %1445 = vmatprep.subr.mxu0 %v48
  %1446 = vmatpush1.msra.mxu0 %v47
  %1447 = vmatprep.subr.mxu0 %v52
  %1448 = vmatpush1.msra.mxu0 %v51
  %1449 = vmatprep.subr.mxu0 %v56
  %1450 = vmatpush1.msra.mxu0 %v55
  %1451 = vmatprep.subr.mxu0 %v60
  %1452 = vmatpush1.msra.mxu0 %v59
  %1453 = vmatprep.subr.mxu0 %v64
  %1454 = vmatpush1.msra.mxu0 %v63
  %1455 = vmatprep.subr.mxu0 %v68
  %1456 = vmatpush1.msra.mxu0 %v67
  %1457 = vmatprep.subr.mxu0 %v72
  %1458 = vmatpush1.msra.mxu0 %v71
  %1459 = vmatprep.subr.mxu0 %v76
  %1460 = vmatpush1.msra.mxu0 %v75
  %1461 = vmatprep.subr.mxu0 %v80
  %1462 = vmatpush1.msra.mxu0 %v79
  %1463 = vmatprep.subr.mxu0 0.0
  %1464 = vmatpush1.msra.mxu0 0.0
  %1465 = vmatprep.subr.mxu0 0.0
  %1466 = vmatpush1.msra.mxu0 0.0
  %1467 = vmatprep.subr.mxu0 0.0
  %1468 = vmatpush1.msra.mxu0 0.0
  %1469 = vmatprep.subr.mxu0 0.0
  %1470 = vmatpush1.msra.mxu0 0.0
  %1471 = vmatprep.subr.mxu0 0.0
  %1472 = vmatpush1.msra.mxu0 0.0
  %1473 = vmatprep.subr.mxu0 0.0
  %1474 = vmatpush1.msra.mxu0 0.0
  %1475 = vmatprep.subr.mxu0 0.0
  %1476 = vmatpush1.msra.mxu0 0.0
  %1477 = vmatprep.subr.mxu0 0.0
  %1478 = vmatpush1.msra.mxu0 0.0
  %1479 = vmatprep.subr.mxu0 0.0
  %1480 = vmatpush1.msra.mxu0 0.0
  %1481 = vmatprep.subr.mxu0 0.0
  %1482 = vmatpush1.msra.mxu0 0.0
  %1483 = vmatprep.subr.mxu0 0.0
  %1484 = vmatpush1.msra.mxu0 0.0
  %1485 = vmatprep.subr.mxu0 0.0
  %1486 = vmatpush1.msra.mxu0 0.0
  %1487 = vmatprep.subr.mxu0 0.0
  %1488 = vmatpush1.msra.mxu0 0.0
  %1489 = vmatprep.subr.mxu0 0.0
  %1490 = vmatpush1.msra.mxu0 0.0
  %1491 = vmatprep.subr.mxu0 0.0
  %1492 = vmatpush1.msra.mxu0 0.0
  %1493 = vmatprep.subr.mxu0 0.0
  %1494 = vmatpush1.msra.mxu0 0.0
  %1495 = vmatprep.mubr.f32.mxu0 0.0
  %1496 = vmatmul.mubr.f32.gmra.mrb[0].mxu0 %v1426
  %v1497 = vpop.f32.mrb[0].mxu0
  %v1498 = vadd.f32 0.0, %v1497
  %v1499 = vpop.f32.mrb[0].mxu0
  %v1500 = vadd.f32 0.0, %v1499
  %1501 = vdwg.mxu0
  %1502 = vmatprep.subr.mxu0 %v22
  %1503 = vmatpush1.msra.mxu0 %v21
  %1504 = vmatprep.subr.mxu0 %v26
  %1505 = vmatpush1.msra.mxu0 %v25
  %1506 = vmatprep.subr.mxu0 %v30
  %1507 = vmatpush1.msra.mxu0 %v29
  %1508 = vmatprep.subr.mxu0 %v34
  %1509 = vmatpush1.msra.mxu0 %v33
  %1510 = vmatprep.subr.mxu0 %v38
  %1511 = vmatpush1.msra.mxu0 %v37
  %1512 = vmatprep.subr.mxu0 %v42
  %1513 = vmatpush1.msra.mxu0 %v41
  %1514 = vmatprep.subr.mxu0 %v46
  %1515 = vmatpush1.msra.mxu0 %v45
  %1516 = vmatprep.subr.mxu0 %v50
  %1517 = vmatpush1.msra.mxu0 %v49
  %1518 = vmatprep.subr.mxu0 %v54
  %1519 = vmatpush1.msra.mxu0 %v53
  %1520 = vmatprep.subr.mxu0 %v58
  %1521 = vmatpush1.msra.mxu0 %v57
  %1522 = vmatprep.subr.mxu0 %v62
  %1523 = vmatpush1.msra.mxu0 %v61
  %1524 = vmatprep.subr.mxu0 %v66
  %1525 = vmatpush1.msra.mxu0 %v65
  %1526 = vmatprep.subr.mxu0 %v70
  %1527 = vmatpush1.msra.mxu0 %v69
  %1528 = vmatprep.subr.mxu0 %v74
  %1529 = vmatpush1.msra.mxu0 %v73
  %1530 = vmatprep.subr.mxu0 %v78
  %1531 = vmatpush1.msra.mxu0 %v77
  %1532 = vmatprep.subr.mxu0 %v82
  %1533 = vmatpush1.msra.mxu0 %v81
  %1534 = vmatprep.subr.mxu0 0.0
  %1535 = vmatpush1.msra.mxu0 0.0
  %1536 = vmatprep.subr.mxu0 0.0
  %1537 = vmatpush1.msra.mxu0 0.0
  %1538 = vmatprep.subr.mxu0 0.0
  %1539 = vmatpush1.msra.mxu0 0.0
  %1540 = vmatprep.subr.mxu0 0.0
  %1541 = vmatpush1.msra.mxu0 0.0
  %1542 = vmatprep.subr.mxu0 0.0
  %1543 = vmatpush1.msra.mxu0 0.0
  %1544 = vmatprep.subr.mxu0 0.0
  %1545 = vmatpush1.msra.mxu0 0.0
  %1546 = vmatprep.subr.mxu0 0.0
  %1547 = vmatpush1.msra.mxu0 0.0
  %1548 = vmatprep.subr.mxu0 0.0
  %1549 = vmatpush1.msra.mxu0 0.0
  %1550 = vmatprep.subr.mxu0 0.0
  %1551 = vmatpush1.msra.mxu0 0.0
  %1552 = vmatprep.subr.mxu0 0.0
  %1553 = vmatpush1.msra.mxu0 0.0
  %1554 = vmatprep.subr.mxu0 0.0
  %1555 = vmatpush1.msra.mxu0 0.0
  %1556 = vmatprep.subr.mxu0 0.0
  %1557 = vmatpush1.msra.mxu0 0.0
  %1558 = vmatprep.subr.mxu0 0.0
  %1559 = vmatpush1.msra.mxu0 0.0
  %1560 = vmatprep.subr.mxu0 0.0
  %1561 = vmatpush1.msra.mxu0 0.0
  %1562 = vmatprep.subr.mxu0 0.0
  %1563 = vmatpush1.msra.mxu0 0.0
  %1564 = vmatprep.subr.mxu0 0.0
  %1565 = vmatpush1.msra.mxu0 0.0
  %1566 = vmatprep.mubr.f32.mxu0 0.0
  %1567 = vmatmul.mubr.f32.gmra.mrb[0].mxu0 %v1426
  %v1568 = vpop.f32.mrb[0].mxu0
  %v1569 = vadd.f32 0.0, %v1568
  %v1570 = vpop.f32.mrb[0].mxu0
  %v1571 = vadd.f32 0.0, %v1570
  %1572 = vdwg.mxu0
  %v1573 = vadd.f32 %v1427, %v1498
  %v1574 = vadd.f32 %v1428, %v1500
  %v1575 = vadd.f32 %v1429, %v1569
  %v1576 = vadd.f32 %v1430, %v1571
  %v1577 = vmul.f32 %v1573, 0.5
  %v1578 = vmul.f32 %v1574, 0.5
  %v1579 = vmul.f32 %v1575, 0.5
  %v1580 = vtanh.pop %v1577
  %v1581 = vtanh.pop %v1578
  %v1582 = vtanh.pop %v1579
  %v1583 = vmul.f32 %v1580, 0.5
  %v1584 = vmul.f32 %v1581, 0.5
  %v1585 = vmul.f32 %v1582, 0.5
  %v1586 = vadd.f32 %v1583, 0.5
  %v1587 = vadd.f32 %v1584, 0.5
  %v1588 = vadd.f32 %v1585, 0.5
  %v1589 = vtanh.pop %v1576
  %v1590 = vmul.f32 %v1587, %v1424
  %v1591 = vmul.f32 %v1586, %v1589
  %v1592 = vadd.f32 %v1590, %v1591
  %v1593 = vtanh.pop %v1592
  %v1594 = vmul.f32 %v1588, %v1593
  %v1595 = vld [vmem:[%s0 + $0x120] sm:$0xff]
  %v1596 = vld [vmem:[%s0 + $0x128] sm:$0xff]
  %v1597 = vld [vmem:[%s0 + $0x130] sm:$0xff]
  %v1598 = vld [vmem:[%s0 + $0x138] sm:$0xff]
  %1599 = vmatprep.subr.mxu0 %v20
  %1600 = vmatpush1.msra.mxu0 %v19
  %1601 = vmatprep.subr.mxu0 %v24
  %1602 = vmatpush1.msra.mxu0 %v23
  %1603 = vmatprep.subr.mxu0 %v28
  %1604 = vmatpush1.msra.mxu0 %v27
  %1605 = vmatprep.subr.mxu0 %v32
  %1606 = vmatpush1.msra.mxu0 %v31
  %1607 = vmatprep.subr.mxu0 %v36
  %1608 = vmatpush1.msra.mxu0 %v35
  %1609 = vmatprep.subr.mxu0 %v40
  %1610 = vmatpush1.msra.mxu0 %v39
  %1611 = vmatprep.subr.mxu0 %v44
  %1612 = vmatpush1.msra.mxu0 %v43
  %1613 = vmatprep.subr.mxu0 %v48
  %1614 = vmatpush1.msra.mxu0 %v47
  %1615 = vmatprep.subr.mxu0 %v52
  %1616 = vmatpush1.msra.mxu0 %v51
  %1617 = vmatprep.subr.mxu0 %v56
  %1618 = vmatpush1.msra.mxu0 %v55
  %1619 = vmatprep.subr.mxu0 %v60
  %1620 = vmatpush1.msra.mxu0 %v59
  %1621 = vmatprep.subr.mxu0 %v64
  %1622 = vmatpush1.msra.mxu0 %v63
  %1623 = vmatprep.subr.mxu0 %v68
  %1624 = vmatpush1.msra.mxu0 %v67
  %1625 = vmatprep.subr.mxu0 %v72
  %1626 = vmatpush1.msra.mxu0 %v71
  %1627 = vmatprep.subr.mxu0 %v76
  %1628 = vmatpush1.msra.mxu0 %v75
  %1629 = vmatprep.subr.mxu0 %v80
  %1630 = vmatpush1.msra.mxu0 %v79
  %1631 = vmatprep.subr.mxu0 0.0
  %1632 = vmatpush1.msra.mxu0 0.0
  %1633 = vmatprep.subr.mxu0 0.0
  %1634 = vmatpush1.msra.mxu0 0.0
  %1635 = vmatprep.subr.mxu0 0.0
  %1636 = vmatpush1.msra.mxu0 0.0
  %1637 = vmatprep.subr.mxu0 0.0
  %1638 = vmatpush1.msra.mxu0 0.0
  %1639 = vmatprep.subr.mxu0 0.0
  %1640 = vmatpush1.msra.mxu0 0.0
  %1641 = vmatprep.subr.mxu0 0.0
  %1642 = vmatpush1.msra.mxu0 0.0
  %1643 = vmatprep.subr.mxu0 0.0
  %1644 = vmatpush1.msra.mxu0 0.0
  %1645 = vmatprep.subr.mxu0 0.0
  %1646 = vmatpush1.msra.mxu0 0.0
  %1647 = vmatprep.subr.mxu0 0.0
  %1648 = vmatpush1.msra.mxu0 0.0
  %1649 = vmatprep.subr.mxu0 0.0
  %1650 = vmatpush1.msra.mxu0 0.0
  %1651 = vmatprep.subr.mxu0 0.0
  %1652 = vmatpush1.msra.mxu0 0.0
  %1653 = vmatprep.subr.mxu0 0.0
  %1654 = vmatpush1.msra.mxu0 0.0
  %1655 = vmatprep.subr.mxu0 0.0
  %1656 = vmatpush1.msra.mxu0 0.0
  %1657 = vmatprep.subr.mxu0 0.0
  %1658 = vmatpush1.msra.mxu0 0.0
  %1659 = vmatprep.subr.mxu0 0.0
  %1660 = vmatpush1.msra.mxu0 0.0
  %1661 = vmatprep.subr.mxu0 0.0
  %1662 = vmatpush1.msra.mxu0 0.0
  %1663 = vmatprep.mubr.f32.mxu0 0.0
  %1664 = vmatmul.mubr.f32.gmra.mrb[0].mxu0 %v1594
  %v1665 = vpop.f32.mrb[0].mxu0
  %v1666 = vadd.f32 0.0, %v1665
  %v1667 = vpop.f32.mrb[0].mxu0
  %v1668 = vadd.f32 0.0, %v1667
  %1669 = vdwg.mxu0
  %1670 = vmatprep.subr.mxu0 %v22
  %1671 = vmatpush1.msra.mxu0 %v21
  %1672 = vmatprep.subr.mxu0 %v26
  %1673 = vmatpush1.msra.mxu0 %v25
  %1674 = vmatprep.subr.mxu0 %v30
  %1675 = vmatpush1.msra.mxu0 %v29
  %1676 = vmatprep.subr.mxu0 %v34
  %1677 = vmatpush1.msra.mxu0 %v33
  %1678 = vmatprep.subr.mxu0 %v38
  %1679 = vmatpush1.msra.mxu0 %v37
  %1680 = vmatprep.subr.mxu0 %v42
  %1681 = vmatpush1.msra.mxu0 %v41
  %1682 = vmatprep.subr.mxu0 %v46
  %1683 = vmatpush1.msra.mxu0 %v45
  %1684 = vmatprep.subr.mxu0 %v50
  %1685 = vmatpush1.msra.mxu0 %v49
  %1686 = vmatprep.subr.mxu0 %v54
  %1687 = vmatpush1.msra.mxu0 %v53
  %1688 = vmatprep.subr.mxu0 %v58
  %1689 = vmatpush1.msra.mxu0 %v57
  %1690 = vmatprep.subr.mxu0 %v62
  %1691 = vmatpush1.msra.mxu0 %v61
  %1692 = vmatprep.subr.mxu0 %v66
  %1693 = vmatpush1.msra.mxu0 %v65
  %1694 = vmatprep.subr.mxu0 %v70
  %1695 = vmatpush1.msra.mxu0 %v69
  %1696 = vmatprep.subr.mxu0 %v74
  %1697 = vmatpush1.msra.mxu0 %v73
  %1698 = vmatprep.subr.mxu0 %v78
  %1699 = vmatpush1.msra.mxu0 %v77
  %1700 = vmatprep.subr.mxu0 %v82
  %1701 = vmatpush1.msra.mxu0 %v81
  %1702 = vmatprep.subr.mxu0 0.0
  %1703 = vmatpush1.msra.mxu0 0.0
  %1704 = vmatprep.subr.mxu0 0.0
  %1705 = vmatpush1.msra.mxu0 0.0
  %1706 = vmatprep.subr.mxu0 0.0
  %1707 = vmatpush1.msra.mxu0 0.0
  %1708 = vmatprep.subr.mxu0 0.0
  %1709 = vmatpush1.msra.mxu0 0.0
  %1710 = vmatprep.subr.mxu0 0.0
  %1711 = vmatpush1.msra.mxu0 0.0
  %1712 = vmatprep.subr.mxu0 0.0
  %1713 = vmatpush1.msra.mxu0 0.0
  %1714 = vmatprep.subr.mxu0 0.0
  %1715 = vmatpush1.msra.mxu0 0.0
  %1716 = vmatprep.subr.mxu0 0.0
  %1717 = vmatpush1.msra.mxu0 0.0
  %1718 = vmatprep.subr.mxu0 0.0
  %1719 = vmatpush1.msra.mxu0 0.0
  %1720 = vmatprep.subr.mxu0 0.0
  %1721 = vmatpush1.msra.mxu0 0.0
  %1722 = vmatprep.subr.mxu0 0.0
  %1723 = vmatpush1.msra.mxu0 0.0
  %1724 = vmatprep.subr.mxu0 0.0
  %1725 = vmatpush1.msra.mxu0 0.0
  %1726 = vmatprep.subr.mxu0 0.0
  %1727 = vmatpush1.msra.mxu0 0.0
  %1728 = vmatprep.subr.mxu0 0.0
  %1729 = vmatpush1.msra.mxu0 0.0
  %1730 = vmatprep.subr.mxu0 0.0
  %1731 = vmatpush1.msra.mxu0 0.0
  %1732 = vmatprep.subr.mxu0 0.0
  %1733 = vmatpush1.msra.mxu0 0.0
  %1734 = vmatprep.mubr.f32.mxu0 0.0
  %1735 = vmatmul.mubr.f32.gmra.mrb[0].mxu0 %v1594
  %v1736 = vpop.f32.mrb[0].mxu0
  %v1737 = vadd.f32 0.0, %v1736
  %v1738 = vpop.f32.mrb[0].mxu0
  %v1739 = vadd.f32 0.0, %v1738
  %1740 = vdwg.mxu0
  %v1741 = vadd.f32 %v1595, %v1666
  %v1742 = vadd.f32 %v1596, %v1668
  %v1743 = vadd.f32 %v1597, %v1737
  %v1744 = vadd.f32 %v1598, %v1739
  %v1745 = vmul.f32 %v1741, 0.5
  %v1746 = vmul.f32 %v1742, 0.5
  %v1747 = vmul.f32 %v1743, 0.5
  %v1748 = vtanh.pop %v1745
  %v1749 = vtanh.pop %v1746
  %v1750 = vtanh.pop %v1747
  %v1751 = vmul.f32 %v1748, 0.5
  %v1752 = vmul.f32 %v1749, 0.5
  %v1753 = vmul.f32 %v1750, 0.5
  %v1754 = vadd.f32 %v1751, 0.5
  %v1755 = vadd.f32 %v1752, 0.5
  %v1756 = vadd.f32 %v1753, 0.5
  %v1757 = vtanh.pop %v1744
  %v1758 = vmul.f32 %v1755, %v1592
  %v1759 = vmul.f32 %v1754, %v1757
  %v1760 = vadd.f32 %v1758, %v1759
  %v1761 = vtanh.pop %v1760
  %v1762 = vmul.f32 %v1756, %v1761
  %v1763 = vld [vmem:[%s0 + $0x140] sm:$0xff]
  %v1764 = vld [vmem:[%s0 + $0x148] sm:$0xff]
  %v1765 = vld [vmem:[%s0 + $0x150] sm:$0xff]
  %v1766 = vld [vmem:[%s0 + $0x158] sm:$0xff]
  %1767 = vmatprep.subr.mxu0 %v20
  %1768 = vmatpush1.msra.mxu0 %v19
  %1769 = vmatprep.subr.mxu0 %v24
  %1770 = vmatpush1.msra.mxu0 %v23
  %1771 = vmatprep.subr.mxu0 %v28
  %1772 = vmatpush1.msra.mxu0 %v27
  %1773 = vmatprep.subr.mxu0 %v32
  %1774 = vmatpush1.msra.mxu0 %v31
  %1775 = vmatprep.subr.mxu0 %v36
  %1776 = vmatpush1.msra.mxu0 %v35
  %1777 = vmatprep.subr.mxu0 %v40
  %1778 = vmatpush1.msra.mxu0 %v39
  %1779 = vmatprep.subr.mxu0 %v44
  %1780 = vmatpush1.msra.mxu0 %v43
  %1781 = vmatprep.subr.mxu0 %v48
  %1782 = vmatpush1.msra.mxu0 %v47
  %1783 = vmatprep.subr.mxu0 %v52
  %1784 = vmatpush1.msra.mxu0 %v51
  %1785 = vmatprep.subr.mxu0 %v56
  %1786 = vmatpush1.msra.mxu0 %v55
  %1787 = vmatprep.subr.mxu0 %v60
  %1788 = vmatpush1.msra.mxu0 %v59
  %1789 = vmatprep.subr.mxu0 %v64
  %1790 = vmatpush1.msra.mxu0 %v63
  %1791 = vmatprep.subr.mxu0 %v68
  %1792 = vmatpush1.msra.mxu0 %v67
  %1793 = vmatprep.subr.mxu0 %v72
  %1794 = vmatpush1.msra.mxu0 %v71
  %1795 = vmatprep.subr.mxu0 %v76
  %1796 = vmatpush1.msra.mxu0 %v75
  %1797 = vmatprep.subr.mxu0 %v80
  %1798 = vmatpush1.msra.mxu0 %v79
  %1799 = vmatprep.subr.mxu0 0.0
  %1800 = vmatpush1.msra.mxu0 0.0
  %1801 = vmatprep.subr.mxu0 0.0
  %1802 = vmatpush1.msra.mxu0 0.0
  %1803 = vmatprep.subr.mxu0 0.0
  %1804 = vmatpush1.msra.mxu0 0.0
  %1805 = vmatprep.subr.mxu0 0.0
  %1806 = vmatpush1.msra.mxu0 0.0
  %1807 = vmatprep.subr.mxu0 0.0
  %1808 = vmatpush1.msra.mxu0 0.0
  %1809 = vmatprep.subr.mxu0 0.0
  %1810 = vmatpush1.msra.mxu0 0.0
  %1811 = vmatprep.subr.mxu0 0.0
  %1812 = vmatpush1.msra.mxu0 0.0
  %1813 = vmatprep.subr.mxu0 0.0
  %1814 = vmatpush1.msra.mxu0 0.0
  %1815 = vmatprep.subr.mxu0 0.0
  %1816 = vmatpush1.msra.mxu0 0.0
  %1817 = vmatprep.subr.mxu0 0.0
  %1818 = vmatpush1.msra.mxu0 0.0
  %1819 = vmatprep.subr.mxu0 0.0
  %1820 = vmatpush1.msra.mxu0 0.0
  %1821 = vmatprep.subr.mxu0 0.0
  %1822 = vmatpush1.msra.mxu0 0.0
  %1823 = vmatprep.subr.mxu0 0.0
  %1824 = vmatpush1.msra.mxu0 0.0
  %1825 = vmatprep.subr.mxu0 0.0
  %1826 = vmatpush1.msra.mxu0 0.0
  %1827 = vmatprep.subr.mxu0 0.0
  %1828 = vmatpush1.msra.mxu0 0.0
  %1829 = vmatprep.subr.mxu0 0.0
  %1830 = vmatpush1.msra.mxu0 0.0
  %1831 = vmatprep.mubr.f32.mxu0 0.0
  %1832 = vmatmul.mubr.f32.gmra.mrb[0].mxu0 %v1762
  %v1833 = vpop.f32.mrb[0].mxu0
  %v1834 = vadd.f32 0.0, %v1833
  %v1835 = vpop.f32.mrb[0].mxu0
  %v1836 = vadd.f32 0.0, %v1835
  %1837 = vdwg.mxu0
  %1838 = vmatprep.subr.mxu0 %v22
  %1839 = vmatpush1.msra.mxu0 %v21
  %1840 = vmatprep.subr.mxu0 %v26
  %1841 = vmatpush1.msra.mxu0 %v25
  %1842 = vmatprep.subr.mxu0 %v30
  %1843 = vmatpush1.msra.mxu0 %v29
  %1844 = vmatprep.subr.mxu0 %v34
  %1845 = vmatpush1.msra.mxu0 %v33
  %1846 = vmatprep.subr.mxu0 %v38
  %1847 = vmatpush1.msra.mxu0 %v37
  %1848 = vmatprep.subr.mxu0 %v42
  %1849 = vmatpush1.msra.mxu0 %v41
  %1850 = vmatprep.subr.mxu0 %v46
  %1851 = vmatpush1.msra.mxu0 %v45
  %1852 = vmatprep.subr.mxu0 %v50
  %1853 = vmatpush1.msra.mxu0 %v49
  %1854 = vmatprep.subr.mxu0 %v54
  %1855 = vmatpush1.msra.mxu0 %v53
  %1856 = vmatprep.subr.mxu0 %v58
  %1857 = vmatpush1.msra.mxu0 %v57
  %1858 = vmatprep.subr.mxu0 %v62
  %1859 = vmatpush1.msra.mxu0 %v61
  %1860 = vmatprep.subr.mxu0 %v66
  %1861 = vmatpush1.msra.mxu0 %v65
  %1862 = vmatprep.subr.mxu0 %v70
  %1863 = vmatpush1.msra.mxu0 %v69
  %1864 = vmatprep.subr.mxu0 %v74
  %1865 = vmatpush1.msra.mxu0 %v73
  %1866 = vmatprep.subr.mxu0 %v78
  %1867 = vmatpush1.msra.mxu0 %v77
  %1868 = vmatprep.subr.mxu0 %v82
  %1869 = vmatpush1.msra.mxu0 %v81
  %1870 = vmatprep.subr.mxu0 0.0
  %1871 = vmatpush1.msra.mxu0 0.0
  %1872 = vmatprep.subr.mxu0 0.0
  %1873 = vmatpush1.msra.mxu0 0.0
  %1874 = vmatprep.subr.mxu0 0.0
  %1875 = vmatpush1.msra.mxu0 0.0
  %1876 = vmatprep.subr.mxu0 0.0
  %1877 = vmatpush1.msra.mxu0 0.0
  %1878 = vmatprep.subr.mxu0 0.0
  %1879 = vmatpush1.msra.mxu0 0.0
  %1880 = vmatprep.subr.mxu0 0.0
  %1881 = vmatpush1.msra.mxu0 0.0
  %1882 = vmatprep.subr.mxu0 0.0
  %1883 = vmatpush1.msra.mxu0 0.0
  %1884 = vmatprep.subr.mxu0 0.0
  %1885 = vmatpush1.msra.mxu0 0.0
  %1886 = vmatprep.subr.mxu0 0.0
  %1887 = vmatpush1.msra.mxu0 0.0
  %1888 = vmatprep.subr.mxu0 0.0
  %1889 = vmatpush1.msra.mxu0 0.0
  %1890 = vmatprep.subr.mxu0 0.0
  %1891 = vmatpush1.msra.mxu0 0.0
  %1892 = vmatprep.subr.mxu0 0.0
  %1893 = vmatpush1.msra.mxu0 0.0
  %1894 = vmatprep.subr.mxu0 0.0
  %1895 = vmatpush1.msra.mxu0 0.0
  %1896 = vmatprep.subr.mxu0 0.0
  %1897 = vmatpush1.msra.mxu0 0.0
  %1898 = vmatprep.subr.mxu0 0.0
  %1899 = vmatpush1.msra.mxu0 0.0
  %1900 = vmatprep.subr.mxu0 0.0
  %1901 = vmatpush1.msra.mxu0 0.0
  %1902 = vmatprep.mubr.f32.mxu0 0.0
  %1903 = vmatmul.mubr.f32.gmra.mrb[0].mxu0 %v1762
  %v1904 = vpop.f32.mrb[0].mxu0
  %v1905 = vadd.f32 0.0, %v1904
  %v1906 = vpop.f32.mrb[0].mxu0
  %v1907 = vadd.f32 0.0, %v1906
  %1908 = vdwg.mxu0
  %v1909 = vadd.f32 %v1763, %v1834
  %v1910 = vadd.f32 %v1764, %v1836
  %v1911 = vadd.f32 %v1765, %v1905
  %v1912 = vadd.f32 %v1766, %v1907
  %v1913 = vmul.f32 %v1909, 0.5
  %v1914 = vmul.f32 %v1910, 0.5
  %v1915 = vmul.f32 %v1911, 0.5
  %v1916 = vtanh.pop %v1913
  %v1917 = vtanh.pop %v1914
  %v1918 = vtanh.pop %v1915
  %v1919 = vmul.f32 %v1916, 0.5
  %v1920 = vmul.f32 %v1917, 0.5
  %v1921 = vmul.f32 %v1918, 0.5
  %v1922 = vadd.f32 %v1919, 0.5
  %v1923 = vadd.f32 %v1920, 0.5
  %v1924 = vadd.f32 %v1921, 0.5
  %v1925 = vtanh.pop %v1912
  %v1926 = vmul.f32 %v1923, %v1760
  %v1927 = vmul.f32 %v1922, %v1925
  %v1928 = vadd.f32 %v1926, %v1927
  %v1929 = vtanh.pop %v1928
  %v1930 = vmul.f32 %v1924, %v1929
  %v1931 = vld [vmem:[%s0 + $0x160] sm:$0xff]
  %v1932 = vld [vmem:[%s0 + $0x168] sm:$0xff]
  %v1933 = vld [vmem:[%s0 + $0x170] sm:$0xff]
  %v1934 = vld [vmem:[%s0 + $0x178] sm:$0xff]
  %1935 = vmatprep.subr.mxu0 %v20
  %1936 = vmatpush1.msra.mxu0 %v19
  %1937 = vmatprep.subr.mxu0 %v24
  %1938 = vmatpush1.msra.mxu0 %v23
  %1939 = vmatprep.subr.mxu0 %v28
  %1940 = vmatpush1.msra.mxu0 %v27
  %1941 = vmatprep.subr.mxu0 %v32
  %1942 = vmatpush1.msra.mxu0 %v31
  %1943 = vmatprep.subr.mxu0 %v36
  %1944 = vmatpush1.msra.mxu0 %v35
  %1945 = vmatprep.subr.mxu0 %v40
  %1946 = vmatpush1.msra.mxu0 %v39
  %1947 = vmatprep.subr.mxu0 %v44
  %1948 = vmatpush1.msra.mxu0 %v43
  %1949 = vmatprep.subr.mxu0 %v48
  %1950 = vmatpush1.msra.mxu0 %v47
  %1951 = vmatprep.subr.mxu0 %v52
  %1952 = vmatpush1.msra.mxu0 %v51
  %1953 = vmatprep.subr.mxu0 %v56
  %1954 = vmatpush1.msra.mxu0 %v55
  %1955 = vmatprep.subr.mxu0 %v60
  %1956 = vmatpush1.msra.mxu0 %v59
  %1957 = vmatprep.subr.mxu0 %v64
  %1958 = vmatpush1.msra.mxu0 %v63
  %1959 = vmatprep.subr.mxu0 %v68
  %1960 = vmatpush1.msra.mxu0 %v67
  %1961 = vmatprep.subr.mxu0 %v72
  %1962 = vmatpush1.msra.mxu0 %v71
  %1963 = vmatprep.subr.mxu0 %v76
  %1964 = vmatpush1.msra.mxu0 %v75
  %1965 = vmatprep.subr.mxu0 %v80
  %1966 = vmatpush1.msra.mxu0 %v79
  %1967 = vmatprep.subr.mxu0 0.0
  %1968 = vmatpush1.msra.mxu0 0.0
  %1969 = vmatprep.subr.mxu0 0.0
  %1970 = vmatpush1.msra.mxu0 0.0
  %1971 = vmatprep.subr.mxu0 0.0
  %1972 = vmatpush1.msra.mxu0 0.0
  %1973 = vmatprep.subr.mxu0 0.0
  %1974 = vmatpush1.msra.mxu0 0.0
  %1975 = vmatprep.subr.mxu0 0.0
  %1976 = vmatpush1.msra.mxu0 0.0
  %1977 = vmatprep.subr.mxu0 0.0
  %1978 = vmatpush1.msra.mxu0 0.0
  %1979 = vmatprep.subr.mxu0 0.0
  %1980 = vmatpush1.msra.mxu0 0.0
  %1981 = vmatprep.subr.mxu0 0.0
  %1982 = vmatpush1.msra.mxu0 0.0
  %1983 = vmatprep.subr.mxu0 0.0
  %1984 = vmatpush1.msra.mxu0 0.0
  %1985 = vmatprep.subr.mxu0 0.0
  %1986 = vmatpush1.msra.mxu0 0.0
  %1987 = vmatprep.subr.mxu0 0.0
  %1988 = vmatpush1.msra.mxu0 0.0
  %1989 = vmatprep.subr.mxu0 0.0
  %1990 = vmatpush1.msra.mxu0 0.0
  %1991 = vmatprep.subr.mxu0 0.0
  %1992 = vmatpush1.msra.mxu0 0.0
  %1993 = vmatprep.subr.mxu0 0.0
  %1994 = vmatpush1.msra.mxu0 0.0
  %1995 = vmatprep.subr.mxu0 0.0
  %1996 = vmatpush1.msra.mxu0 0.0
  %1997 = vmatprep.subr.mxu0 0.0
  %1998 = vmatpush1.msra.mxu0 0.0
  %1999 = vmatprep.mubr.f32.mxu0 0.0
  %2000 = vmatmul.mubr.f32.gmra.mrb[0].mxu0 %v1930
  %v2001 = vpop.f32.mrb[0].mxu0
  %v2002 = vadd.f32 0.0, %v2001
  %v2003 = vpop.f32.mrb[0].mxu0
  %v2004 = vadd.f32 0.0, %v2003
  %2005 = vdwg.mxu0
  %2006 = vmatprep.subr.mxu0 %v22
  %2007 = vmatpush1.msra.mxu0 %v21
  %2008 = vmatprep.subr.mxu0 %v26
  %2009 = vmatpush1.msra.mxu0 %v25
  %2010 = vmatprep.subr.mxu0 %v30
  %2011 = vmatpush1.msra.mxu0 %v29
  %2012 = vmatprep.subr.mxu0 %v34
  %2013 = vmatpush1.msra.mxu0 %v33
  %2014 = vmatprep.subr.mxu0 %v38
  %2015 = vmatpush1.msra.mxu0 %v37
  %2016 = vmatprep.subr.mxu0 %v42
  %2017 = vmatpush1.msra.mxu0 %v41
  %2018 = vmatprep.subr.mxu0 %v46
  %2019 = vmatpush1.msra.mxu0 %v45
  %2020 = vmatprep.subr.mxu0 %v50
  %2021 = vmatpush1.msra.mxu0 %v49
  %2022 = vmatprep.subr.mxu0 %v54
  %2023 = vmatpush1.msra.mxu0 %v53
  %2024 = vmatprep.subr.mxu0 %v58
  %2025 = vmatpush1.msra.mxu0 %v57
  %2026 = vmatprep.subr.mxu0 %v62
  %2027 = vmatpush1.msra.mxu0 %v61
  %2028 = vmatprep.subr.mxu0 %v66
  %2029 = vmatpush1.msra.mxu0 %v65
  %2030 = vmatprep.subr.mxu0 %v70
  %2031 = vmatpush1.msra.mxu0 %v69
  %2032 = vmatprep.subr.mxu0 %v74
  %2033 = vmatpush1.msra.mxu0 %v73
  %2034 = vmatprep.subr.mxu0 %v78
  %2035 = vmatpush1.msra.mxu0 %v77
  %2036 = vmatprep.subr.mxu0 %v82
  %2037 = vmatpush1.msra.mxu0 %v81
  %2038 = vmatprep.subr.mxu0 0.0
  %2039 = vmatpush1.msra.mxu0 0.0
  %2040 = vmatprep.subr.mxu0 0.0
  %2041 = vmatpush1.msra.mxu0 0.0
  %2042 = vmatprep.subr.mxu0 0.0
  %2043 = vmatpush1.msra.mxu0 0.0
  %2044 = vmatprep.subr.mxu0 0.0
  %2045 = vmatpush1.msra.mxu0 0.0
  %2046 = vmatprep.subr.mxu0 0.0
  %2047 = vmatpush1.msra.mxu0 0.0
  %2048 = vmatprep.subr.mxu0 0.0
  %2049 = vmatpush1.msra.mxu0 0.0
  %2050 = vmatprep.subr.mxu0 0.0
  %2051 = vmatpush1.msra.mxu0 0.0
  %2052 = vmatprep.subr.mxu0 0.0
  %2053 = vmatpush1.msra.mxu0 0.0
  %2054 = vmatprep.subr.mxu0 0.0
  %2055 = vmatpush1.msra.mxu0 0.0
  %2056 = vmatprep.subr.mxu0 0.0
  %2057 = vmatpush1.msra.mxu0 0.0
  %2058 = vmatprep.subr.mxu0 0.0
  %2059 = vmatpush1.msra.mxu0 0.0
  %2060 = vmatprep.subr.mxu0 0.0
  %2061 = vmatpush1.msra.mxu0 0.0
  %2062 = vmatprep.subr.mxu0 0.0
  %2063 = vmatpush1.msra.mxu0 0.0
  %2064 = vmatprep.subr.mxu0 0.0
  %2065 = vmatpush1.msra.mxu0 0.0
  %2066 = vmatprep.subr.mxu0 0.0
  %2067 = vmatpush1.msra.mxu0 0.0
  %2068 = vmatprep.subr.mxu0 0.0
  %2069 = vmatpush1.msra.mxu0 0.0
  %2070 = vmatprep.mubr.f32.mxu0 0.0
  %2071 = vmatmul.mubr.f32.gmra.mrb[0].mxu0 %v1930
  %v2072 = vpop.f32.mrb[0].mxu0
  %v2073 = vadd.f32 0.0, %v2072
  %v2074 = vpop.f32.mrb[0].mxu0
  %v2075 = vadd.f32 0.0, %v2074
  %2076 = vdwg.mxu0
  %v2077 = vadd.f32 %v1931, %v2002
  %v2078 = vadd.f32 %v1932, %v2004
  %v2079 = vadd.f32 %v1933, %v2073
  %v2080 = vadd.f32 %v1934, %v2075
  %v2081 = vmul.f32 %v2077, 0.5
  %v2082 = vmul.f32 %v2078, 0.5
  %v2083 = vmul.f32 %v2079, 0.5
  %v2084 = vtanh.pop %v2081
  %v2085 = vtanh.pop %v2082
  %v2086 = vtanh.pop %v2083
  %v2087 = vmul.f32 %v2084, 0.5
  %v2088 = vmul.f32 %v2085, 0.5
  %v2089 = vmul.f32 %v2086, 0.5
  %v2090 = vadd.f32 %v2087, 0.5
  %v2091 = vadd.f32 %v2088, 0.5
  %v2092 = vadd.f32 %v2089, 0.5
  %v2093 = vtanh.pop %v2080
  %v2094 = vmul.f32 %v2091, %v1928
  %v2095 = vmul.f32 %v2090, %v2093
  %v2096 = vadd.f32 %v2094, %v2095
  %v2097 = vtanh.pop %v2096
  %v2098 = vmul.f32 %v2092, %v2097
  %v2099 = vld [vmem:[%s0 + $0x180] sm:$0xff]
  %v2100 = vld [vmem:[%s0 + $0x188] sm:$0xff]
  %v2101 = vld [vmem:[%s0 + $0x190] sm:$0xff]
  %v2102 = vld [vmem:[%s0 + $0x198] sm:$0xff]
  %2103 = vmatprep.subr.mxu0 %v20
  %2104 = vmatpush1.msra.mxu0 %v19
  %2105 = vmatprep.subr.mxu0 %v24
  %2106 = vmatpush1.msra.mxu0 %v23
  %2107 = vmatprep.subr.mxu0 %v28
  %2108 = vmatpush1.msra.mxu0 %v27
  %2109 = vmatprep.subr.mxu0 %v32
  %2110 = vmatpush1.msra.mxu0 %v31
  %2111 = vmatprep.subr.mxu0 %v36
  %2112 = vmatpush1.msra.mxu0 %v35
  %2113 = vmatprep.subr.mxu0 %v40
  %2114 = vmatpush1.msra.mxu0 %v39
  %2115 = vmatprep.subr.mxu0 %v44
  %2116 = vmatpush1.msra.mxu0 %v43
  %2117 = vmatprep.subr.mxu0 %v48
  %2118 = vmatpush1.msra.mxu0 %v47
  %2119 = vmatprep.subr.mxu0 %v52
  %2120 = vmatpush1.msra.mxu0 %v51
  %2121 = vmatprep.subr.mxu0 %v56
  %2122 = vmatpush1.msra.mxu0 %v55
  %2123 = vmatprep.subr.mxu0 %v60
  %2124 = vmatpush1.msra.mxu0 %v59
  %2125 = vmatprep.subr.mxu0 %v64
  %2126 = vmatpush1.msra.mxu0 %v63
  %2127 = vmatprep.subr.mxu0 %v68
  %2128 = vmatpush1.msra.mxu0 %v67
  %2129 = vmatprep.subr.mxu0 %v72
  %2130 = vmatpush1.msra.mxu0 %v71
  %2131 = vmatprep.subr.mxu0 %v76
  %2132 = vmatpush1.msra.mxu0 %v75
  %2133 = vmatprep.subr.mxu0 %v80
  %2134 = vmatpush1.msra.mxu0 %v79
  %2135 = vmatprep.subr.mxu0 0.0
  %2136 = vmatpush1.msra.mxu0 0.0
  %2137 = vmatprep.subr.mxu0 0.0
  %2138 = vmatpush1.msra.mxu0 0.0
  %2139 = vmatprep.subr.mxu0 0.0
  %2140 = vmatpush1.msra.mxu0 0.0
  %2141 = vmatprep.subr.mxu0 0.0
  %2142 = vmatpush1.msra.mxu0 0.0
  %2143 = vmatprep.subr.mxu0 0.0
  %2144 = vmatpush1.msra.mxu0 0.0
  %2145 = vmatprep.subr.mxu0 0.0
  %2146 = vmatpush1.msra.mxu0 0.0
  %2147 = vmatprep.subr.mxu0 0.0
  %2148 = vmatpush1.msra.mxu0 0.0
  %2149 = vmatprep.subr.mxu0 0.0
  %2150 = vmatpush1.msra.mxu0 0.0
  %2151 = vmatprep.subr.mxu0 0.0
  %2152 = vmatpush1.msra.mxu0 0.0
  %2153 = vmatprep.subr.mxu0 0.0
  %2154 = vmatpush1.msra.mxu0 0.0
  %2155 = vmatprep.subr.mxu0 0.0
  %2156 = vmatpush1.msra.mxu0 0.0
  %2157 = vmatprep.subr.mxu0 0.0
  %2158 = vmatpush1.msra.mxu0 0.0
  %2159 = vmatprep.subr.mxu0 0.0
  %2160 = vmatpush1.msra.mxu0 0.0
  %2161 = vmatprep.subr.mxu0 0.0
  %2162 = vmatpush1.msra.mxu0 0.0
  %2163 = vmatprep.subr.mxu0 0.0
  %2164 = vmatpush1.msra.mxu0 0.0
  %2165 = vmatprep.subr.mxu0 0.0
  %2166 = vmatpush1.msra.mxu0 0.0
  %2167 = vmatprep.mubr.f32.mxu0 0.0
  %2168 = vmatmul.mubr.f32.gmra.mrb[0].mxu0 %v2098
  %v2169 = vpop.f32.mrb[0].mxu0
  %v2170 = vadd.f32 0.0, %v2169
  %v2171 = vpop.f32.mrb[0].mxu0
  %v2172 = vadd.f32 0.0, %v2171
  %2173 = vdwg.mxu0
  %2174 = vmatprep.subr.mxu0 %v22
  %2175 = vmatpush1.msra.mxu0 %v21
  %2176 = vmatprep.subr.mxu0 %v26
  %2177 = vmatpush1.msra.mxu0 %v25
  %2178 = vmatprep.subr.mxu0 %v30
  %2179 = vmatpush1.msra.mxu0 %v29
  %2180 = vmatprep.subr.mxu0 %v34
  %2181 = vmatpush1.msra.mxu0 %v33
  %2182 = vmatprep.subr.mxu0 %v38
  %2183 = vmatpush1.msra.mxu0 %v37
  %2184 = vmatprep.subr.mxu0 %v42
  %2185 = vmatpush1.msra.mxu0 %v41
  %2186 = vmatprep.subr.mxu0 %v46
  %2187 = vmatpush1.msra.mxu0 %v45
  %2188 = vmatprep.subr.mxu0 %v50
  %2189 = vmatpush1.msra.mxu0 %v49
  %2190 = vmatprep.subr.mxu0 %v54
  %2191 = vmatpush1.msra.mxu0 %v53
  %2192 = vmatprep.subr.mxu0 %v58
  %2193 = vmatpush1.msra.mxu0 %v57
  %2194 = vmatprep.subr.mxu0 %v62
  %2195 = vmatpush1.msra.mxu0 %v61
  %2196 = vmatprep.subr.mxu0 %v66
  %2197 = vmatpush1.msra.mxu0 %v65
  %2198 = vmatprep.subr.mxu0 %v70
  %2199 = vmatpush1.msra.mxu0 %v69
  %2200 = vmatprep.subr.mxu0 %v74
  %2201 = vmatpush1.msra.mxu0 %v73
  %2202 = vmatprep.subr.mxu0 %v78
  %2203 = vmatpush1.msra.mxu0 %v77
  %2204 = vmatprep.subr.mxu0 %v82
  %2205 = vmatpush1.msra.mxu0 %v81
  %2206 = vmatprep.subr.mxu0 0.0
  %2207 = vmatpush1.msra.mxu0 0.0
  %2208 = vmatprep.subr.mxu0 0.0
  %2209 = vmatpush1.msra.mxu0 0.0
  %2210 = vmatprep.subr.mxu0 0.0
  %2211 = vmatpush1.msra.mxu0 0.0
  %2212 = vmatprep.subr.mxu0 0.0
  %2213 = vmatpush1.msra.mxu0 0.0
  %2214 = vmatprep.subr.mxu0 0.0
  %2215 = vmatpush1.msra.mxu0 0.0
  %2216 = vmatprep.subr.mxu0 0.0
  %2217 = vmatpush1.msra.mxu0 0.0
  %2218 = vmatprep.subr.mxu0 0.0
  %2219 = vmatpush1.msra.mxu0 0.0
  %2220 = vmatprep.subr.mxu0 0.0
  %2221 = vmatpush1.msra.mxu0 0.0
  %2222 = vmatprep.subr.mxu0 0.0
  %2223 = vmatpush1.msra.mxu0 0.0
  %2224 = vmatprep.subr.mxu0 0.0
  %2225 = vmatpush1.msra.mxu0 0.0
  %2226 = vmatprep.subr.mxu0 0.0
  %2227 = vmatpush1.msra.mxu0 0.0
  %2228 = vmatprep.subr.mxu0 0.0
  %2229 = vmatpush1.msra.mxu0 0.0
  %2230 = vmatprep.subr.mxu0 0.0
  %2231 = vmatpush1.msra.mxu0 0.0
  %2232 = vmatprep.subr.mxu0 0.0
  %2233 = vmatpush1.msra.mxu0 0.0
  %2234 = vmatprep.subr.mxu0 0.0
  %2235 = vmatpush1.msra.mxu0 0.0
  %2236 = vmatprep.subr.mxu0 0.0
  %2237 = vmatpush1.msra.mxu0 0.0
  %2238 = vmatprep.mubr.f32.mxu0 0.0
  %2239 = vmatmul.mubr.f32.gmra.mrb[0].mxu0 %v2098
  %v2240 = vpop.f32.mrb[0].mxu0
  %v2241 = vadd.f32 0.0, %v2240
  %v2242 = vpop.f32.mrb[0].mxu0
  %v2243 = vadd.f32 0.0, %v2242
  %2244 = vdwg.mxu0
  %v2245 = vadd.f32 %v2099, %v2170
  %v2246 = vadd.f32 %v2100, %v2172
  %v2247 = vadd.f32 %v2101, %v2241
  %v2248 = vadd.f32 %v2102, %v2243
  %v2249 = vmul.f32 %v2245, 0.5
  %v2250 = vmul.f32 %v2246, 0.5
  %v2251 = vmul.f32 %v2247, 0.5
  %v2252 = vtanh.pop %v2249
  %v2253 = vtanh.pop %v2250
  %v2254 = vtanh.pop %v2251
  %v2255 = vmul.f32 %v2252, 0.5
  %v2256 = vmul.f32 %v2253, 0.5
  %v2257 = vmul.f32 %v2254, 0.5
  %v2258 = vadd.f32 %v2255, 0.5
  %v2259 = vadd.f32 %v2256, 0.5
  %v2260 = vadd.f32 %v2257, 0.5
  %v2261 = vtanh.pop %v2248
  %v2262 = vmul.f32 %v2259, %v2096
  %v2263 = vmul.f32 %v2258, %v2261
  %v2264 = vadd.f32 %v2262, %v2263
  %v2265 = vtanh.pop %v2264
  %v2266 = vmul.f32 %v2260, %v2265
  %v2267 = vld [vmem:[%s0 + $0x1a0] sm:$0xff]
  %v2268 = vld [vmem:[%s0 + $0x1a8] sm:$0xff]
  %v2269 = vld [vmem:[%s0 + $0x1b0] sm:$0xff]
  %v2270 = vld [vmem:[%s0 + $0x1b8] sm:$0xff]
  %2271 = vmatprep.subr.mxu0 %v20
  %2272 = vmatpush1.msra.mxu0 %v19
  %2273 = vmatprep.subr.mxu0 %v24
  %2274 = vmatpush1.msra.mxu0 %v23
  %2275 = vmatprep.subr.mxu0 %v28
  %2276 = vmatpush1.msra.mxu0 %v27
  %2277 = vmatprep.subr.mxu0 %v32
  %2278 = vmatpush1.msra.mxu0 %v31
  %2279 = vmatprep.subr.mxu0 %v36
  %2280 = vmatpush1.msra.mxu0 %v35
  %2281 = vmatprep.subr.mxu0 %v40
  %2282 = vmatpush1.msra.mxu0 %v39
  %2283 = vmatprep.subr.mxu0 %v44
  %2284 = vmatpush1.msra.mxu0 %v43
  %2285 = vmatprep.subr.mxu0 %v48
  %2286 = vmatpush1.msra.mxu0 %v47
  %2287 = vmatprep.subr.mxu0 %v52
  %2288 = vmatpush1.msra.mxu0 %v51
  %2289 = vmatprep.subr.mxu0 %v56
  %2290 = vmatpush1.msra.mxu0 %v55
  %2291 = vmatprep.subr.mxu0 %v60
  %2292 = vmatpush1.msra.mxu0 %v59
  %2293 = vmatprep.subr.mxu0 %v64
  %2294 = vmatpush1.msra.mxu0 %v63
  %2295 = vmatprep.subr.mxu0 %v68
  %2296 = vmatpush1.msra.mxu0 %v67
  %2297 = vmatprep.subr.mxu0 %v72
  %2298 = vmatpush1.msra.mxu0 %v71
  %2299 = vmatprep.subr.mxu0 %v76
  %2300 = vmatpush1.msra.mxu0 %v75
  %2301 = vmatprep.subr.mxu0 %v80
  %2302 = vmatpush1.msra.mxu0 %v79
  %2303 = vmatprep.subr.mxu0 0.0
  %2304 = vmatpush1.msra.mxu0 0.0
  %2305 = vmatprep.subr.mxu0 0.0
  %2306 = vmatpush1.msra.mxu0 0.0
  %2307 = vmatprep.subr.mxu0 0.0
  %2308 = vmatpush1.msra.mxu0 0.0
  %2309 = vmatprep.subr.mxu0 0.0
  %2310 = vmatpush1.msra.mxu0 0.0
  %2311 = vmatprep.subr.mxu0 0.0
  %2312 = vmatpush1.msra.mxu0 0.0
  %2313 = vmatprep.subr.mxu0 0.0
  %2314 = vmatpush1.msra.mxu0 0.0
  %2315 = vmatprep.subr.mxu0 0.0
  %2316 = vmatpush1.msra.mxu0 0.0
  %2317 = vmatprep.subr.mxu0 0.0
  %2318 = vmatpush1.msra.mxu0 0.0
  %2319 = vmatprep.subr.mxu0 0.0
  %2320 = vmatpush1.msra.mxu0 0.0
  %2321 = vmatprep.subr.mxu0 0.0
  %2322 = vmatpush1.msra.mxu0 0.0
  %2323 = vmatprep.subr.mxu0 0.0
  %2324 = vmatpush1.msra.mxu0 0.0
  %2325 = vmatprep.subr.mxu0 0.0
  %2326 = vmatpush1.msra.mxu0 0.0
  %2327 = vmatprep.subr.mxu0 0.0
  %2328 = vmatpush1.msra.mxu0 0.0
  %2329 = vmatprep.subr.mxu0 0.0
  %2330 = vmatpush1.msra.mxu0 0.0
  %2331 = vmatprep.subr.mxu0 0.0
  %2332 = vmatpush1.msra.mxu0 0.0
  %2333 = vmatprep.subr.mxu0 0.0
  %2334 = vmatpush1.msra.mxu0 0.0
  %2335 = vmatprep.mubr.f32.mxu0 0.0
  %2336 = vmatmul.mubr.f32.gmra.mrb[0].mxu0 %v2266
  %v2337 = vpop.f32.mrb[0].mxu0
  %v2338 = vadd.f32 0.0, %v2337
  %v2339 = vpop.f32.mrb[0].mxu0
  %v2340 = vadd.f32 0.0, %v2339
  %2341 = vdwg.mxu0
  %2342 = vmatprep.subr.mxu0 %v22
  %2343 = vmatpush1.msra.mxu0 %v21
  %2344 = vmatprep.subr.mxu0 %v26
  %2345 = vmatpush1.msra.mxu0 %v25
  %2346 = vmatprep.subr.mxu0 %v30
  %2347 = vmatpush1.msra.mxu0 %v29
  %2348 = vmatprep.subr.mxu0 %v34
  %2349 = vmatpush1.msra.mxu0 %v33
  %2350 = vmatprep.subr.mxu0 %v38
  %2351 = vmatpush1.msra.mxu0 %v37
  %2352 = vmatprep.subr.mxu0 %v42
  %2353 = vmatpush1.msra.mxu0 %v41
  %2354 = vmatprep.subr.mxu0 %v46
  %2355 = vmatpush1.msra.mxu0 %v45
  %2356 = vmatprep.subr.mxu0 %v50
  %2357 = vmatpush1.msra.mxu0 %v49
  %2358 = vmatprep.subr.mxu0 %v54
  %2359 = vmatpush1.msra.mxu0 %v53
  %2360 = vmatprep.subr.mxu0 %v58
  %2361 = vmatpush1.msra.mxu0 %v57
  %2362 = vmatprep.subr.mxu0 %v62
  %2363 = vmatpush1.msra.mxu0 %v61
  %2364 = vmatprep.subr.mxu0 %v66
  %2365 = vmatpush1.msra.mxu0 %v65
  %2366 = vmatprep.subr.mxu0 %v70
  %2367 = vmatpush1.msra.mxu0 %v69
  %2368 = vmatprep.subr.mxu0 %v74
  %2369 = vmatpush1.msra.mxu0 %v73
  %2370 = vmatprep.subr.mxu0 %v78
  %2371 = vmatpush1.msra.mxu0 %v77
  %2372 = vmatprep.subr.mxu0 %v82
  %2373 = vmatpush1.msra.mxu0 %v81
  %2374 = vmatprep.subr.mxu0 0.0
  %2375 = vmatpush1.msra.mxu0 0.0
  %2376 = vmatprep.subr.mxu0 0.0
  %2377 = vmatpush1.msra.mxu0 0.0
  %2378 = vmatprep.subr.mxu0 0.0
  %2379 = vmatpush1.msra.mxu0 0.0
  %2380 = vmatprep.subr.mxu0 0.0
  %2381 = vmatpush1.msra.mxu0 0.0
  %2382 = vmatprep.subr.mxu0 0.0
  %2383 = vmatpush1.msra.mxu0 0.0
  %2384 = vmatprep.subr.mxu0 0.0
  %2385 = vmatpush1.msra.mxu0 0.0
  %2386 = vmatprep.subr.mxu0 0.0
  %2387 = vmatpush1.msra.mxu0 0.0
  %2388 = vmatprep.subr.mxu0 0.0
  %2389 = vmatpush1.msra.mxu0 0.0
  %2390 = vmatprep.subr.mxu0 0.0
  %2391 = vmatpush1.msra.mxu0 0.0
  %2392 = vmatprep.subr.mxu0 0.0
  %2393 = vmatpush1.msra.mxu0 0.0
  %2394 = vmatprep.subr.mxu0 0.0
  %2395 = vmatpush1.msra.mxu0 0.0
  %2396 = vmatprep.subr.mxu0 0.0
  %2397 = vmatpush1.msra.mxu0 0.0
  %2398 = vmatprep.subr.mxu0 0.0
  %2399 = vmatpush1.msra.mxu0 0.0
  %2400 = vmatprep.subr.mxu0 0.0
  %2401 = vmatpush1.msra.mxu0 0.0
  %2402 = vmatprep.subr.mxu0 0.0
  %2403 = vmatpush1.msra.mxu0 0.0
  %2404 = vmatprep.subr.mxu0 0.0
  %2405 = vmatpush1.msra.mxu0 0.0
  %2406 = vmatprep.mubr.f32.mxu0 0.0
  %2407 = vmatmul.mubr.f32.gmra.mrb[0].mxu0 %v2266
  %v2408 = vpop.f32.mrb[0].mxu0
  %v2409 = vadd.f32 0.0, %v2408
  %v2410 = vpop.f32.mrb[0].mxu0
  %v2411 = vadd.f32 0.0, %v2410
  %2412 = vdwg.mxu0
  %v2413 = vadd.f32 %v2267, %v2338
  %v2414 = vadd.f32 %v2268, %v2340
  %v2415 = vadd.f32 %v2269, %v2409
  %v2416 = vadd.f32 %v2270, %v2411
  %v2417 = vmul.f32 %v2413, 0.5
  %v2418 = vmul.f32 %v2414, 0.5
  %v2419 = vmul.f32 %v2415, 0.5
  %v2420 = vtanh.pop %v2417
  %v2421 = vtanh.pop %v2418
  %v2422 = vtanh.pop %v2419
  %v2423 = vmul.f32 %v2420, 0.5
  %v2424 = vmul.f32 %v2421, 0.5
  %v2425 = vmul.f32 %v2422, 0.5
  %v2426 = vadd.f32 %v2423, 0.5
  %v2427 = vadd.f32 %v2424, 0.5
  %v2428 = vadd.f32 %v2425, 0.5
  %v2429 = vtanh.pop %v2416
  %v2430 = vmul.f32 %v2427, %v2264
  %v2431 = vmul.f32 %v2426, %v2429
  %v2432 = vadd.f32 %v2430, %v2431
  %v2433 = vtanh.pop %v2432
  %v2434 = vmul.f32 %v2428, %v2433
  %v2435 = vld [vmem:[%s2] sm:$0x1]
  %v2437 = vlaneseq
  %v2438 = vshrl.u32 %v2437, 7
  %v2439 = vsub.s32 0, %v2438
  %v2440 = vrot.slane %v2435, %v2439
  %v2442 = vmul.f32 %v2434, %v2440
  %2443 = vadd.xlane.f32.xlu0 %v2442
  %v2444 = vpop.xlane.xlu0 %2443
  %v2445 = vld [vmem:[#allocation2] sm:$0x1]
  %v2447 = vlaneseq
  %v2448 = vshrl.u32 %v2447, 7
  %v2449 = vsub.s32 0, %v2448
  %v2450 = vrot.slane %v2445, %v2449
  %v2452 = vadd.f32 %v2444, %v2450
  %vm2453 = vcmask 7168
  %2454 = vst.msk [vmem:[%s4] sm:$0xff] %vm2453, %v2452
  // Predicated region
  $region18: #{sumo_nn_forward.1} parent=0 // pred_check
    _
  $region19: #{sumo_nn_forward.1} parent=0 // pred_check_branch
    %2456 = sbr.rel (0) target = $region21
  $region20: #{sumo_nn_forward.1} parent=0 // pred_region
    _
  $region21: #{sumo_nn_forward.1} parent=0 // pred_fallthru
    _
  // Predicated region
  $region22: #{sumo_nn_forward.1} parent=0 // pred_check
    _
  $region23: #{sumo_nn_forward.1} parent=0 // pred_check_branch
    %2458 = sbr.rel (0) target = $region25
  $region24: #{sumo_nn_forward.1} parent=0 // pred_region
    _
  $region25: #{sumo_nn_forward.1} parent=0 // pred_fallthru
    _

</llo_original>
